<compile_context>
chip_gen: v6e
topology: v6e:2x2x1
jax: 0.10.0
libtpu: 0.0.40
codegen_flags: <defaults>
</compile_context>

<pallas_src>
import functools

import jax
import jax.numpy as jnp
from jax.experimental import pallas as pl
from jax.experimental.pallas import tpu as pltpu


# --------------------------------------------------------------------------
# dist_func: concrete deterministic choice matching dist_func(x, mu=scalar),
# broadcastable against the network output: returns x[..., -1:] - mu, (N, 1).
# --------------------------------------------------------------------------
def distance_func(x, mu):
    return x[..., -1:] - mu


def _round_up(n, m):
    return ((n + m - 1) // m) * m


# --------------------------------------------------------------------------
# Pallas kernel: one batch tile of the forward pass (distance factor + MLP).
# --------------------------------------------------------------------------
def _nn_dirichlet_kernel(n_layers, mu_ref, x_ref, *refs):
    param_refs = refs[:-1]          # interleaved [W0, b0, W1, b1, ...], W in (in, out) layout
    o_ref = refs[-1]

    x = x_ref[...]                  # (tile_n, D_in)
    mu = mu_ref[0, 0]               # scalar (global first-row last feature), from SMEM
    dist = x[:, -1:] - mu           # (tile_n, 1) == distance_func(x, mu)

    h = x
    for i in range(n_layers):
        w = param_refs[2 * i][...]      # (in, out)   -- pre-transposed in the wrapper
        b = param_refs[2 * i + 1][...]  # (1, out)
        h = jnp.dot(h, w, preferred_element_type=jnp.float32) + b
        if i < n_layers - 1:
            h = jnp.maximum(h, 0.0)     # relu on all but the last layer

    o_ref[...] = (dist * h).astype(o_ref.dtype)


# --------------------------------------------------------------------------
# Wrapper: glue (mu extraction, layout padding, batch tiling) + pallas_call.
# params: list of (W_t, b) with W_t shape (in, out), b shape (1, out).
# --------------------------------------------------------------------------
def nn_dirichlet_param_forward(x, params, *, tile_n=512):
    n_layers = len(params)
    batch, d_in = x.shape
    out_dim = params[-1][0].shape[1]

    # mu from the GLOBAL first row (must be hoisted out of the tiled kernel).
    mu = x.reshape(-1, x.shape[-1])[0, -1].reshape(1, 1).astype(jnp.float32)

    # Zero-pad the last layer's output dim to 128 lanes -> lane-dense stores.
    padded_out = _round_up(max(out_dim, 128), 128)
    w_last, b_last = params[-1]
    w_last_p = jnp.pad(w_last, ((0, 0), (0, padded_out - out_dim)))
    b_last_p = jnp.pad(b_last, ((0, 0), (0, padded_out - out_dim)))
    padded_params = list(params[:-1]) + [(w_last_p, b_last_p)]

    flat_params = []
    for w_t, b in padded_params:
        flat_params.extend([w_t, b])

    # Row-tile the batch; pad up to a multiple of the tile size.
    tile_n = min(tile_n, _round_up(batch, 8))
    padded_batch = _round_up(batch, tile_n)
    x_p = jnp.pad(x, ((0, padded_batch - batch), (0, 0))) if padded_batch != batch else x

    grid = (padded_batch // tile_n,)

    flops = 2 * padded_batch * sum(int(w.shape[0] * w.shape[1]) for w, _ in padded_params)
    bytes_accessed = 4 * (int(x_p.size) + padded_batch * padded_out
                          + sum(int(p.size) for p in flat_params) + 1)

    kernel = functools.partial(_nn_dirichlet_kernel, n_layers)

    out_padded = pl.pallas_call(
        kernel,
        out_shape=jax.ShapeDtypeStruct((padded_batch, padded_out), x.dtype),
        grid=grid,
        in_specs=[
            # mu: tiny scalar, lives in SMEM, shared by every grid step.
            pl.BlockSpec(memory_space=pltpu.MemorySpace.SMEM),
            # x: row-tiled, pipelined across the batch grid.
            pl.BlockSpec((tile_n, d_in), lambda i: (i, 0)),
        ] + [
            # weights/biases: full-array blocks, constant index -> fetched once.
            pl.BlockSpec(p.shape, lambda i: (0, 0)) for p in flat_params
        ],
        out_specs=pl.BlockSpec((tile_n, padded_out), lambda i: (i, 0)),
        compiler_params=pltpu.CompilerParams(
            dimension_semantics=("parallel",),
            vmem_limit_bytes=32 * 1024 * 1024,
        ),
        cost_estimate=pl.CostEstimate(
            flops=flops, transcendentals=0, bytes_accessed=bytes_accessed),
    )(mu, x_p, *flat_params)

    return out_padded[:batch, :out_dim]


# --------------------------------------------------------------------------
# Deterministic parameter construction (PyTorch nn.Linear default init:
# uniform(-1/sqrt(fan_in), 1/sqrt(fan_in)) for both weight and bias).
# --------------------------------------------------------------------------
def init_params(nn_list, key):
    params = []
    for i in range(len(nn_list) - 1):
        fan_in, fan_out = nn_list[i], nn_list[i + 1]
        key, kw, kb = jax.random.split(key, 3)
        bound = 1.0 / jnp.sqrt(jnp.float32(fan_in))
        w = jax.random.uniform(kw, (fan_out, fan_in), jnp.float32, -bound, bound)
        b = jax.random.uniform(kb, (fan_out,), jnp.float32, -bound, bound)
        # glue: pre-transpose to (in, out), reshape bias to (1, out)
        params.append((w.T, b.reshape(1, fan_out)))
    return params


# --------------------------------------------------------------------------
# Pure-JAX reference (mirrors the PyTorch forward) for a sanity check.
# --------------------------------------------------------------------------
def reference_forward(x, params):
    mu = x.reshape(-1, x.shape[-1])[0, -1]
    dist = distance_func(x, mu)
    h = x
    for w_t, b in params[:-1]:
        h = jnp.maximum(h @ w_t + b, 0.0)
    w_t, b = params[-1]
    return dist * (h @ w_t + b)


if __name__ == "__main__":
    # nn_list = [in_features, hidden, hidden, out_features]
    nn_list = [4, 32, 32, 3]
    batch = 1000  # exercises the batch grid (tile 512 -> 2 steps) and padding

    key = jax.random.PRNGKey(0)
    key, kx = jax.random.split(key)
    x = jax.random.normal(kx, (batch, nn_list[0]), jnp.float32)

    params = init_params(nn_list, key)

    out = nn_dirichlet_param_forward(x, params)
    out = jax.block_until_ready(out)

    ref = reference_forward(x, params)
    assert out.shape == (batch, nn_list[-1])
    assert jnp.allclose(out, ref, atol=2e-5, rtol=2e-5), "mismatch vs JAX reference"

    print("KERNEL_OK")
</pallas_src>

<mosaic_0001>
module attributes {stable_mosaic.version = 11 : i64} {
  func.func @_nn_dirichlet_kernel(%arg0: i32, %arg1: memref<1x1xf32, #tpu.memory_space<smem>>, %arg2: memref<512x4xf32, #tpu.memory_space<vmem>>, %arg3: memref<4x32xf32, #tpu.memory_space<vmem>>, %arg4: memref<1x32xf32, #tpu.memory_space<vmem>>, %arg5: memref<32x32xf32, #tpu.memory_space<vmem>>, %arg6: memref<1x32xf32, #tpu.memory_space<vmem>>, %arg7: memref<32x128xf32, #tpu.memory_space<vmem>>, %arg8: memref<1x128xf32, #tpu.memory_space<vmem>>, %arg9: memref<512x128xf32, #tpu.memory_space<vmem>>) attributes {dimension_semantics = [#tpu.dimension_semantics<parallel>], iteration_bounds = array<i64: 2>, scalar_prefetch = 0 : i64, scratch_operands = 0 : i64, tpu.core_type = #tpu.core_type<tc>, window_params = [{transform_indices = @transform_0, window_bounds = array<i64: 1, 1>}, {transform_indices = @transform_1, window_bounds = array<i64: 512, 4>}, {pipeline_mode = #tpu.pipeline_mode<synchronous>, transform_indices = @transform_2, window_bounds = array<i64: 4, 32>}, {pipeline_mode = #tpu.pipeline_mode<synchronous>, transform_indices = @transform_3, window_bounds = array<i64: 1, 32>}, {pipeline_mode = #tpu.pipeline_mode<synchronous>, transform_indices = @transform_4, window_bounds = array<i64: 32, 32>}, {pipeline_mode = #tpu.pipeline_mode<synchronous>, transform_indices = @transform_5, window_bounds = array<i64: 1, 32>}, {pipeline_mode = #tpu.pipeline_mode<synchronous>, transform_indices = @transform_6, window_bounds = array<i64: 32, 128>}, {pipeline_mode = #tpu.pipeline_mode<synchronous>, transform_indices = @transform_7, window_bounds = array<i64: 1, 128>}, {transform_indices = @transform_8, window_bounds = array<i64: 512, 128>}]} {
    %c0 = arith.constant 0 : index
    %c0_0 = arith.constant 0 : index
    %0 = vector.load %arg2[%c0, %c0_0] : memref<512x4xf32, #tpu.memory_space<vmem>>, vector<512x4xf32>
    %c0_1 = arith.constant 0 : index
    %c0_2 = arith.constant 0 : index
    %1 = memref.load %arg1[%c0_1, %c0_2] : memref<1x1xf32, #tpu.memory_space<smem>>
    %2 = vector.extract_strided_slice %0 {offsets = [0, 3], sizes = [512, 1], strides = [1, 1]} : vector<512x4xf32> to vector<512x1xf32>
    %3 = vector.broadcast %1 : f32 to vector<512x1xf32>
    %4 = arith.subf %2, %3 : vector<512x1xf32>
    %c0_3 = arith.constant 0 : index
    %c0_4 = arith.constant 0 : index
    %5 = vector.load %arg3[%c0_3, %c0_4] : memref<4x32xf32, #tpu.memory_space<vmem>>, vector<4x32xf32>
    %c0_5 = arith.constant 0 : index
    %c0_6 = arith.constant 0 : index
    %6 = vector.load %arg4[%c0_5, %c0_6] : memref<1x32xf32, #tpu.memory_space<vmem>>, vector<1x32xf32>
    %cst = arith.constant dense<0.000000e+00> : vector<512x32xf32>
    %7 = tpu.matmul %0, %5, %cst {dimension_numbers = #tpu.dot_dimension_numbers<[1], [0], [0], [1], [0, 0, 1, 1], [], []>} : vector<512x4xf32>, vector<4x32xf32>, vector<512x32xf32> -> vector<512x32xf32>
    %8 = vector.broadcast %6 : vector<1x32xf32> to vector<512x32xf32>
    %9 = arith.addf %7, %8 : vector<512x32xf32>
    %cst_7 = arith.constant 0.000000e+00 : f32
    %10 = vector.broadcast %cst_7 : f32 to vector<512x32xf32>
    %11 = arith.maximumf %9, %10 : vector<512x32xf32>
    %c0_8 = arith.constant 0 : index
    %c0_9 = arith.constant 0 : index
    %12 = vector.load %arg5[%c0_8, %c0_9] : memref<32x32xf32, #tpu.memory_space<vmem>>, vector<32x32xf32>
    %c0_10 = arith.constant 0 : index
    %c0_11 = arith.constant 0 : index
    %13 = vector.load %arg6[%c0_10, %c0_11] : memref<1x32xf32, #tpu.memory_space<vmem>>, vector<1x32xf32>
    %cst_12 = arith.constant dense<0.000000e+00> : vector<512x32xf32>
    %14 = tpu.matmul %11, %12, %cst_12 {dimension_numbers = #tpu.dot_dimension_numbers<[1], [0], [0], [1], [0, 0, 1, 1], [], []>} : vector<512x32xf32>, vector<32x32xf32>, vector<512x32xf32> -> vector<512x32xf32>
    %15 = vector.broadcast %13 : vector<1x32xf32> to vector<512x32xf32>
    %16 = arith.addf %14, %15 : vector<512x32xf32>
    %cst_13 = arith.constant 0.000000e+00 : f32
    %17 = vector.broadcast %cst_13 : f32 to vector<512x32xf32>
    %18 = arith.maximumf %16, %17 : vector<512x32xf32>
    %c0_14 = arith.constant 0 : index
    %c0_15 = arith.constant 0 : index
    %19 = vector.load %arg7[%c0_14, %c0_15] : memref<32x128xf32, #tpu.memory_space<vmem>>, vector<32x128xf32>
    %c0_16 = arith.constant 0 : index
    %c0_17 = arith.constant 0 : index
    %20 = vector.load %arg8[%c0_16, %c0_17] : memref<1x128xf32, #tpu.memory_space<vmem>>, vector<1x128xf32>
    %cst_18 = arith.constant dense<0.000000e+00> : vector<512x128xf32>
    %21 = tpu.matmul %18, %19, %cst_18 {dimension_numbers = #tpu.dot_dimension_numbers<[1], [0], [0], [1], [0, 0, 1, 1], [], []>} : vector<512x32xf32>, vector<32x128xf32>, vector<512x128xf32> -> vector<512x128xf32>
    %22 = vector.broadcast %20 : vector<1x128xf32> to vector<512x128xf32>
    %23 = arith.addf %21, %22 : vector<512x128xf32>
    %24 = vector.broadcast %4 : vector<512x1xf32> to vector<512x128xf32>
    %25 = arith.mulf %24, %23 : vector<512x128xf32>
    %c0_19 = arith.constant 0 : index
    %c0_20 = arith.constant 0 : index
    %26 = vector.load %arg9[%c0_19, %c0_20] : memref<512x128xf32, #tpu.memory_space<vmem>>, vector<512x128xf32>
    tpu.vector_store %arg9[%c0_19, %c0_20], %25 {strides = array<i32>} : memref<512x128xf32, #tpu.memory_space<vmem>>, vector<512x128xf32>,
    return
  }
  func.func @transform_0(%arg0: i32) -> (i32, i32) {
    %c0_i32 = arith.constant 0 : i32
    %c0_i32_0 = arith.constant 0 : i32
    %c0_i32_1 = arith.constant 0 : i32
    return %c0_i32, %c0_i32_0 : i32, i32
  }
  func.func @transform_1(%arg0: i32) -> (i32, i32) {
    %c0_i32 = arith.constant 0 : i32
    %c0_i32_0 = arith.constant 0 : i32
    return %arg0, %c0_i32 : i32, i32
  }
  func.func @transform_2(%arg0: i32) -> (i32, i32) {
    %c0_i32 = arith.constant 0 : i32
    %c0_i32_0 = arith.constant 0 : i32
    %c0_i32_1 = arith.constant 0 : i32
    return %c0_i32, %c0_i32_0 : i32, i32
  }
  func.func @transform_3(%arg0: i32) -> (i32, i32) {
    %c0_i32 = arith.constant 0 : i32
    %c0_i32_0 = arith.constant 0 : i32
    %c0_i32_1 = arith.constant 0 : i32
    return %c0_i32, %c0_i32_0 : i32, i32
  }
  func.func @transform_4(%arg0: i32) -> (i32, i32) {
    %c0_i32 = arith.constant 0 : i32
    %c0_i32_0 = arith.constant 0 : i32
    %c0_i32_1 = arith.constant 0 : i32
    return %c0_i32, %c0_i32_0 : i32, i32
  }
  func.func @transform_5(%arg0: i32) -> (i32, i32) {
    %c0_i32 = arith.constant 0 : i32
    %c0_i32_0 = arith.constant 0 : i32
    %c0_i32_1 = arith.constant 0 : i32
    return %c0_i32, %c0_i32_0 : i32, i32
  }
  func.func @transform_6(%arg0: i32) -> (i32, i32) {
    %c0_i32 = arith.constant 0 : i32
    %c0_i32_0 = arith.constant 0 : i32
    %c0_i32_1 = arith.constant 0 : i32
    return %c0_i32, %c0_i32_0 : i32, i32
  }
  func.func @transform_7(%arg0: i32) -> (i32, i32) {
    %c0_i32 = arith.constant 0 : i32
    %c0_i32_0 = arith.constant 0 : i32
    %c0_i32_1 = arith.constant 0 : i32
    return %c0_i32, %c0_i32_0 : i32, i32
  }
  func.func @transform_8(%arg0: i32) -> (i32, i32) {
    %c0_i32 = arith.constant 0 : i32
    %c0_i32_0 = arith.constant 0 : i32
    return %arg0, %c0_i32 : i32, i32
  }
}

</mosaic_0001>

<llo_original>
// kernel: tpu_custom_call.1
$region0: #{tpu_custom_call.1}
  #allocation0 [shape = 'u32[]', space=smem, size = 0x4, offset = 0x4, fixed_abs, tag = 'smem constant byte address 0x4 - core index']
  #allocation1 [shape = 'u32[144,128]{1,0:T(1,128)}', space=vmem, size = 0x12000, scoped, tag = 'internal scratch']
  #allocation2 [shape = 'f32[1,1]{1,0:T(1,128)S(6)}', space=smem, size = 0x200, scoped, tag = 'scoped memory for tpu_custom_call.1']
  %s0 = inlined_call_operand.<no memory space> [shape: f32[1,1], index: 0, kind: input, shape index: {}]
  %s1 = inlined_call_operand.vmem [shape: f32[1024,4], index: 1, kind: input, shape index: {}]
  %s2 = inlined_call_operand.vmem [shape: f32[4,32], index: 2, kind: input, shape index: {}]
  %s3 = inlined_call_operand.vmem [shape: f32[1,32], index: 3, kind: input, shape index: {}]
  %s4 = inlined_call_operand.vmem [shape: f32[32,32], index: 4, kind: input, shape index: {}]
  %s5 = inlined_call_operand.vmem [shape: f32[1,32], index: 5, kind: input, shape index: {}]
  %s6 = inlined_call_operand.vmem [shape: f32[32,128], index: 6, kind: input, shape index: {}]
  %s7 = inlined_call_operand.vmem [shape: f32[1,128], index: 7, kind: input, shape index: {}]
  %s8 = inlined_call_operand.hbm [shape: f32[1024,128], index: 8, kind: output, shape index: {}]
  %s9 = sld [smem:[#allocation0]]
  $region65: #{tpu_custom_call.1} parent=0
    _
  %s11 = ssub.s32 1, %s9
  %s12 = scalar_select 0, %s11, %s9
  %13 = sst [smem:[#allocation2]] %s0
  $region1: #{tpu_custom_call.1} parent=0
    #allocation3 [shape = 'u8[524288]{0}', space=vmem, size = 0x80000, scoped, tag = 'output window, operand 0']
    #allocation4 [shape = 's32[2]{0}', space=sflag, size = 0x8, scoped, tag = 'scoped memory for tpu_custom_call.1']
    %14 = vsyncpa [#allocation4], 0
    %s15 = scalar_lea.sflag [#allocation4], 1
    %16 = vsyncpa %s15, 0
    loop: start=0, step=1, limit=4
    $region2: #{tpu_custom_call.1} parent=1 // loop_pre_header
      _
    $region3: #{tpu_custom_call.1} parent=1 // loop_header
      %s18 = sphi 0, %s22
      %p19 = scmp.ge.s32.totalorder %s18, 4
      %s26 = sphi 0, %s26
      %s28 = sphi 0, %s26
      %s29 = sphi 0, %s28
      %s43 = sphi 0, %s29
      %s49 = sphi 0, %s51
      %s52 = sphi 0, %s49
      %s53 = sphi 0, %s52
      %s69 = sphi 0, %s53
      %s73 = sphi 0, %s73
      %s75 = sphi 0, %s73
      %s76 = sphi 0, %s75
      %s90 = sphi 0, %s76
      %s94 = sphi 0, %s94
      %s96 = sphi 0, %s94
      %s97 = sphi 0, %s96
      %s111 = sphi 0, %s97
      %s115 = sphi 0, %s115
      %s117 = sphi 0, %s115
      %s118 = sphi 0, %s117
      %s132 = sphi 0, %s118
      %s136 = sphi 0, %s136
      %s138 = sphi 0, %s136
      %s139 = sphi 0, %s138
      %s153 = sphi 0, %s139
      %s157 = sphi 0, %s157
      %s159 = sphi 0, %s157
      %s160 = sphi 0, %s159
      %s174 = sphi 0, %s160
      %s178 = sphi 0, %s178
      %s180 = sphi 0, %s178
      %s181 = sphi 0, %s180
      %s195 = sphi 0, %s181
      %s201 = sphi 0, %s203
      %s204 = sphi 0, %s201
      %s205 = sphi 0, %s204
      %s221 = sphi 0, %s205
    $region4: #{tpu_custom_call.1} parent=1 // loop_header_branch
      %21 = sbr.rel (%p19) target = $region8
    $region5: #{tpu_custom_call.1} parent=1 // loop_body
      %s23 = ssub.s32 %s18, 1
      %s24 = ssub.s32 %s18, 2
      %s25 = sadd.s32 %s18, 1
      %s27 = sadd.s32 %s26, 1
      %p30 = scmp.eq.s32.totalorder %s18, 1
      %p31 = scmp.ne.s32.totalorder %s26, %s28
      %p32 = scmp.eq.s32.totalorder %s18, 0
      %p33 = por %p31, %p32
      %p34 = scmp.ne.s32.totalorder %s26, %s28
      %p35 = scmp.eq.s32.totalorder %s23, 1
      %p36 = por %p34, %p35
      %p37 = scmp.ne.s32.totalorder %s28, %s29
      %p38 = scmp.eq.s32.totalorder %s23, 0
      %p39 = por %p37, %p38
      %p40 = scmp.ne.s32.totalorder %s28, %s29
      %p41 = scmp.eq.s32.totalorder %s24, 1
      %p42 = por %p40, %p41
      %p44 = scmp.ne.s32.totalorder %s29, %s43
      %p45 = scmp.eq.s32.totalorder %s24, 0
      %p46 = por %p44, %p45
      %s47 = ssub.s32 %s18, %s25
      %p48 = scmp.eq.s32.totalorder %s47, 0
      %s50 = sadd.s32 %s49, 1
      %s51 = scalar_select %p48, %s49, %s50
      %p54 = pneg %p48
      %p55 = scmp.eq.s32.totalorder %s18, 1
      %p56 = por %p54, %p55
      %p57 = scmp.ne.s32.totalorder %s49, %s52
      %p58 = scmp.eq.s32.totalorder %s18, 0
      %p59 = por %p57, %p58
      %p60 = scmp.ne.s32.totalorder %s49, %s52
      %p61 = scmp.eq.s32.totalorder %s23, 1
      %p62 = por %p60, %p61
      %p63 = scmp.ne.s32.totalorder %s52, %s53
      %p64 = scmp.eq.s32.totalorder %s23, 0
      %p65 = por %p63, %p64
      %p66 = scmp.ne.s32.totalorder %s52, %s53
      %p67 = scmp.eq.s32.totalorder %s24, 1
      %p68 = por %p66, %p67
      %p70 = scmp.ne.s32.totalorder %s53, %s69
      %p71 = scmp.eq.s32.totalorder %s24, 0
      %p72 = por %p70, %p71
      %s74 = sadd.s32 %s73, 1
      %p77 = scmp.eq.s32.totalorder %s18, 1
      %p78 = scmp.ne.s32.totalorder %s73, %s75
      %p79 = scmp.eq.s32.totalorder %s18, 0
      %p80 = por %p78, %p79
      %p81 = scmp.ne.s32.totalorder %s73, %s75
      %p82 = scmp.eq.s32.totalorder %s23, 1
      %p83 = por %p81, %p82
      %p84 = scmp.ne.s32.totalorder %s75, %s76
      %p85 = scmp.eq.s32.totalorder %s23, 0
      %p86 = por %p84, %p85
      %p87 = scmp.ne.s32.totalorder %s75, %s76
      %p88 = scmp.eq.s32.totalorder %s24, 1
      %p89 = por %p87, %p88
      %p91 = scmp.ne.s32.totalorder %s76, %s90
      %p92 = scmp.eq.s32.totalorder %s24, 0
      %p93 = por %p91, %p92
      %s95 = sadd.s32 %s94, 1
      %p98 = scmp.eq.s32.totalorder %s18, 1
      %p99 = scmp.ne.s32.totalorder %s94, %s96
      %p100 = scmp.eq.s32.totalorder %s18, 0
      %p101 = por %p99, %p100
      %p102 = scmp.ne.s32.totalorder %s94, %s96
      %p103 = scmp.eq.s32.totalorder %s23, 1
      %p104 = por %p102, %p103
      %p105 = scmp.ne.s32.totalorder %s96, %s97
      %p106 = scmp.eq.s32.totalorder %s23, 0
      %p107 = por %p105, %p106
      %p108 = scmp.ne.s32.totalorder %s96, %s97
      %p109 = scmp.eq.s32.totalorder %s24, 1
      %p110 = por %p108, %p109
      %p112 = scmp.ne.s32.totalorder %s97, %s111
      %p113 = scmp.eq.s32.totalorder %s24, 0
      %p114 = por %p112, %p113
      %s116 = sadd.s32 %s115, 1
      %p119 = scmp.eq.s32.totalorder %s18, 1
      %p120 = scmp.ne.s32.totalorder %s115, %s117
      %p121 = scmp.eq.s32.totalorder %s18, 0
      %p122 = por %p120, %p121
      %p123 = scmp.ne.s32.totalorder %s115, %s117
      %p124 = scmp.eq.s32.totalorder %s23, 1
      %p125 = por %p123, %p124
      %p126 = scmp.ne.s32.totalorder %s117, %s118
      %p127 = scmp.eq.s32.totalorder %s23, 0
      %p128 = por %p126, %p127
      %p129 = scmp.ne.s32.totalorder %s117, %s118
      %p130 = scmp.eq.s32.totalorder %s24, 1
      %p131 = por %p129, %p130
      %p133 = scmp.ne.s32.totalorder %s118, %s132
      %p134 = scmp.eq.s32.totalorder %s24, 0
      %p135 = por %p133, %p134
      %s137 = sadd.s32 %s136, 1
      %p140 = scmp.eq.s32.totalorder %s18, 1
      %p141 = scmp.ne.s32.totalorder %s136, %s138
      %p142 = scmp.eq.s32.totalorder %s18, 0
      %p143 = por %p141, %p142
      %p144 = scmp.ne.s32.totalorder %s136, %s138
      %p145 = scmp.eq.s32.totalorder %s23, 1
      %p146 = por %p144, %p145
      %p147 = scmp.ne.s32.totalorder %s138, %s139
      %p148 = scmp.eq.s32.totalorder %s23, 0
      %p149 = por %p147, %p148
      %p150 = scmp.ne.s32.totalorder %s138, %s139
      %p151 = scmp.eq.s32.totalorder %s24, 1
      %p152 = por %p150, %p151
      %p154 = scmp.ne.s32.totalorder %s139, %s153
      %p155 = scmp.eq.s32.totalorder %s24, 0
      %p156 = por %p154, %p155
      %s158 = sadd.s32 %s157, 1
      %p161 = scmp.eq.s32.totalorder %s18, 1
      %p162 = scmp.ne.s32.totalorder %s157, %s159
      %p163 = scmp.eq.s32.totalorder %s18, 0
      %p164 = por %p162, %p163
      %p165 = scmp.ne.s32.totalorder %s157, %s159
      %p166 = scmp.eq.s32.totalorder %s23, 1
      %p167 = por %p165, %p166
      %p168 = scmp.ne.s32.totalorder %s159, %s160
      %p169 = scmp.eq.s32.totalorder %s23, 0
      %p170 = por %p168, %p169
      %p171 = scmp.ne.s32.totalorder %s159, %s160
      %p172 = scmp.eq.s32.totalorder %s24, 1
      %p173 = por %p171, %p172
      %p175 = scmp.ne.s32.totalorder %s160, %s174
      %p176 = scmp.eq.s32.totalorder %s24, 0
      %p177 = por %p175, %p176
      %s179 = sadd.s32 %s178, 1
      %p182 = scmp.eq.s32.totalorder %s18, 1
      %p183 = scmp.ne.s32.totalorder %s178, %s180
      %p184 = scmp.eq.s32.totalorder %s18, 0
      %p185 = por %p183, %p184
      %p186 = scmp.ne.s32.totalorder %s178, %s180
      %p187 = scmp.eq.s32.totalorder %s23, 1
      %p188 = por %p186, %p187
      %p189 = scmp.ne.s32.totalorder %s180, %s181
      %p190 = scmp.eq.s32.totalorder %s23, 0
      %p191 = por %p189, %p190
      %p192 = scmp.ne.s32.totalorder %s180, %s181
      %p193 = scmp.eq.s32.totalorder %s24, 1
      %p194 = por %p192, %p193
      %p196 = scmp.ne.s32.totalorder %s181, %s195
      %p197 = scmp.eq.s32.totalorder %s24, 0
      %p198 = por %p196, %p197
      %s199 = ssub.s32 %s18, %s25
      %p200 = scmp.eq.s32.totalorder %s199, 0
      %s202 = sadd.s32 %s201, 1
      %s203 = scalar_select %p200, %s201, %s202
      %p206 = pneg %p200
      %p207 = scmp.eq.s32.totalorder %s18, 1
      %p208 = por %p206, %p207
      %p209 = scmp.ne.s32.totalorder %s201, %s204
      %p210 = scmp.eq.s32.totalorder %s18, 0
      %p211 = por %p209, %p210
      %p212 = scmp.ne.s32.totalorder %s201, %s204
      %p213 = scmp.eq.s32.totalorder %s23, 1
      %p214 = por %p212, %p213
      %p215 = scmp.ne.s32.totalorder %s204, %s205
      %p216 = scmp.eq.s32.totalorder %s23, 0
      %p217 = por %p215, %p216
      %p218 = scmp.ne.s32.totalorder %s204, %s205
      %p219 = scmp.eq.s32.totalorder %s24, 1
      %p220 = por %p218, %p219
      %p222 = scmp.ne.s32.totalorder %s205, %s221
      %p223 = scmp.eq.s32.totalorder %s24, 0
      %p224 = por %p222, %p223
      %p225 = scmp.le.s32.totalorder 1, %s18
      %p226 = scmp.lt.s32.totalorder %s18, 3
      %p227 = pnand %p225, %p226
      %p228 = pneg %p227
      // Predicated region
      $region9: #{tpu_custom_call.1} parent=5 // pred_check
        _
      $region10: #{tpu_custom_call.1} parent=5 // pred_check_branch
        %230 = sbr.rel (%p227) target = $region12
      $region11: #{tpu_custom_call.1} parent=5 // pred_region
        %s231 = ssub.s32 %s18, 1
        // Predicated region
        $region13: #{tpu_custom_call.1} parent=11 // pred_check
          %p232 = pneg %p39
        $region14: #{tpu_custom_call.1} parent=11 // pred_check_branch
          %234 = sbr.rel (%p232) target = $region16
        $region15: #{tpu_custom_call.1} parent=11 // pred_region
          _
        $region16: #{tpu_custom_call.1} parent=11 // pred_fallthru
          _
        // Predicated region
        $region17: #{tpu_custom_call.1} parent=11 // pred_check
          %p235 = pneg %p86
        $region18: #{tpu_custom_call.1} parent=11 // pred_check_branch
          %237 = sbr.rel (%p235) target = $region20
        $region19: #{tpu_custom_call.1} parent=11 // pred_region
          _
        $region20: #{tpu_custom_call.1} parent=11 // pred_fallthru
          _
        // Predicated region
        $region21: #{tpu_custom_call.1} parent=11 // pred_check
          %p238 = pneg %p107
        $region22: #{tpu_custom_call.1} parent=11 // pred_check_branch
          %240 = sbr.rel (%p238) target = $region24
        $region23: #{tpu_custom_call.1} parent=11 // pred_region
          _
        $region24: #{tpu_custom_call.1} parent=11 // pred_fallthru
          _
        // Predicated region
        $region25: #{tpu_custom_call.1} parent=11 // pred_check
          %p241 = pneg %p128
        $region26: #{tpu_custom_call.1} parent=11 // pred_check_branch
          %243 = sbr.rel (%p241) target = $region28
        $region27: #{tpu_custom_call.1} parent=11 // pred_region
          _
        $region28: #{tpu_custom_call.1} parent=11 // pred_fallthru
          _
        // Predicated region
        $region29: #{tpu_custom_call.1} parent=11 // pred_check
          %p244 = pneg %p149
        $region30: #{tpu_custom_call.1} parent=11 // pred_check_branch
          %246 = sbr.rel (%p244) target = $region32
        $region31: #{tpu_custom_call.1} parent=11 // pred_region
          _
        $region32: #{tpu_custom_call.1} parent=11 // pred_fallthru
          _
        // Predicated region
        $region33: #{tpu_custom_call.1} parent=11 // pred_check
          %p247 = pneg %p170
        $region34: #{tpu_custom_call.1} parent=11 // pred_check_branch
          %249 = sbr.rel (%p247) target = $region36
        $region35: #{tpu_custom_call.1} parent=11 // pred_region
          _
        $region36: #{tpu_custom_call.1} parent=11 // pred_fallthru
          _
        // Predicated region
        $region37: #{tpu_custom_call.1} parent=11 // pred_check
          %p250 = pneg %p191
        $region38: #{tpu_custom_call.1} parent=11 // pred_check_branch
          %252 = sbr.rel (%p250) target = $region40
        $region39: #{tpu_custom_call.1} parent=11 // pred_region
          _
        $region40: #{tpu_custom_call.1} parent=11 // pred_fallthru
          _
      $region12: #{tpu_custom_call.1} parent=5 // pred_fallthru
        _
      %p253 = scmp.lt.s32.totalorder %s18, 2
      // Predicated region
      $region41: #{tpu_custom_call.1} parent=5 // pred_check
        %p254 = pneg %p253
      $region42: #{tpu_custom_call.1} parent=5 // pred_check_branch
        %256 = sbr.rel (%p254) target = $region44
      $region43: #{tpu_custom_call.1} parent=5 // pred_region
        // Predicated region
        $region45: #{tpu_custom_call.1} parent=43 // pred_check
          %p257 = pneg %p59
        $region46: #{tpu_custom_call.1} parent=43 // pred_check_branch
          %259 = sbr.rel (%p257) target = $region48
        $region47: #{tpu_custom_call.1} parent=43 // pred_region
          %s260 = smul.u32 64, %s18
          %p261 = scmp.lt.s32.totalorder %s260, 127
          %s262 = scalar_select %p261, %s260, 127
          %s263 = smul.addr %s262, 8
          %s264 = scalar_lea.vmem %s1, %s263
          %s265 = smul.u32 64, %s18
        $region48: #{tpu_custom_call.1} parent=43 // pred_fallthru
          _
      $region44: #{tpu_custom_call.1} parent=5 // pred_fallthru
        _
      %p266 = scmp.le.s32.totalorder 1, %s18
      %p267 = scmp.lt.s32.totalorder %s18, 3
      %p268 = pnand %p266, %p267
      %p269 = pneg %p268
      // Predicated region
      $region49: #{tpu_custom_call.1} parent=5 // pred_check
        _
      $region50: #{tpu_custom_call.1} parent=5 // pred_check_branch
        %271 = sbr.rel (%p268) target = $region52
      $region51: #{tpu_custom_call.1} parent=5 // pred_region
        %s272 = ssub.s32 %s18, 1
        %p273 = pneg %p39
        %p274 = pneg %p36
        %s275 = smul.u32 64, %s23
        %p276 = scmp.lt.s32.totalorder %s275, 127
        %s277 = scalar_select %p276, %s275, 127
        %s278 = smul.addr %s277, 8
        %s279 = scalar_lea.vmem %s1, %s278
        %p280 = pneg %p65
        %p281 = pneg %p62
        %p282 = pneg %p86
        %p283 = pneg %p83
        %p284 = pneg %p107
        %p285 = pneg %p104
        %p286 = pneg %p128
        %p287 = pneg %p125
        %p288 = pneg %p149
        %p289 = pneg %p146
        %p290 = pneg %p170
        %p291 = pneg %p167
        %p292 = pneg %p191
        %p293 = pneg %p188
        %p294 = pneg %p217
        %p295 = pneg %p214
        %s296 = sand.u32 %s204, 1
        %s297 = scalar_lea.sflag [#allocation4], %s296
        %s298 = sand.u32 %s204, 1
        %s299 = smul.addr %s298, 512
        %s300 = scalar_lea.vmem [#allocation3], %s299
        %s301 = smul.u32 64, %s23
        %p302 = scmp.lt.s32.totalorder %s301, 127
        %s303 = scalar_select %p302, %s301, 127
        %s304 = smul.addr %s303, 8
        %s305 = scalar_lea.vmem %s1, %s304
        %s306 = smul.u32 64, %s23
        %s307 = smul.u32 64, %s23
        %v308 = vld [vmem:[%s305] sm:$0xff]
        %v309 = vld [vmem:[%s305 + $0x8] sm:$0xff]
        %v310 = vld [vmem:[%s305 + $0x10] sm:$0xff]
        %v311 = vld [vmem:[%s305 + $0x18] sm:$0xff]
        %v312 = vld [vmem:[%s305 + $0x20] sm:$0xff]
        %v313 = vld [vmem:[%s305 + $0x28] sm:$0xff]
        %v314 = vld [vmem:[%s305 + $0x30] sm:$0xff]
        %v315 = vld [vmem:[%s305 + $0x38] sm:$0xff]
        %v316 = vld [vmem:[%s305 + $0x40] sm:$0xff]
        %v317 = vld [vmem:[%s305 + $0x48] sm:$0xff]
        %v318 = vld [vmem:[%s305 + $0x50] sm:$0xff]
        %v319 = vld [vmem:[%s305 + $0x58] sm:$0xff]
        %v320 = vld [vmem:[%s305 + $0x60] sm:$0xff]
        %v321 = vld [vmem:[%s305 + $0x68] sm:$0xff]
        %v322 = vld [vmem:[%s305 + $0x70] sm:$0xff]
        %v323 = vld [vmem:[%s305 + $0x78] sm:$0xff]
        %v324 = vld [vmem:[%s305 + $0x80] sm:$0xff]
        %v325 = vld [vmem:[%s305 + $0x88] sm:$0xff]
        %v326 = vld [vmem:[%s305 + $0x90] sm:$0xff]
        %v327 = vld [vmem:[%s305 + $0x98] sm:$0xff]
        %v328 = vld [vmem:[%s305 + $0xa0] sm:$0xff]
        %v329 = vld [vmem:[%s305 + $0xa8] sm:$0xff]
        %v330 = vld [vmem:[%s305 + $0xb0] sm:$0xff]
        %v331 = vld [vmem:[%s305 + $0xb8] sm:$0xff]
        %v332 = vld [vmem:[%s305 + $0xc0] sm:$0xff]
        %v333 = vld [vmem:[%s305 + $0xc8] sm:$0xff]
        %v334 = vld [vmem:[%s305 + $0xd0] sm:$0xff]
        %v335 = vld [vmem:[%s305 + $0xd8] sm:$0xff]
        %v336 = vld [vmem:[%s305 + $0xe0] sm:$0xff]
        %v337 = vld [vmem:[%s305 + $0xe8] sm:$0xff]
        %v338 = vld [vmem:[%s305 + $0xf0] sm:$0xff]
        %v339 = vld [vmem:[%s305 + $0xf8] sm:$0xff]
        %v340 = vld [vmem:[%s305 + $0x100] sm:$0xff]
        %v341 = vld [vmem:[%s305 + $0x108] sm:$0xff]
        %v342 = vld [vmem:[%s305 + $0x110] sm:$0xff]
        %v343 = vld [vmem:[%s305 + $0x118] sm:$0xff]
        %v344 = vld [vmem:[%s305 + $0x120] sm:$0xff]
        %v345 = vld [vmem:[%s305 + $0x128] sm:$0xff]
        %v346 = vld [vmem:[%s305 + $0x130] sm:$0xff]
        %v347 = vld [vmem:[%s305 + $0x138] sm:$0xff]
        %v348 = vld [vmem:[%s305 + $0x140] sm:$0xff]
        %v349 = vld [vmem:[%s305 + $0x148] sm:$0xff]
        %v350 = vld [vmem:[%s305 + $0x150] sm:$0xff]
        %v351 = vld [vmem:[%s305 + $0x158] sm:$0xff]
        %v352 = vld [vmem:[%s305 + $0x160] sm:$0xff]
        %v353 = vld [vmem:[%s305 + $0x168] sm:$0xff]
        %v354 = vld [vmem:[%s305 + $0x170] sm:$0xff]
        %v355 = vld [vmem:[%s305 + $0x178] sm:$0xff]
        %v356 = vld [vmem:[%s305 + $0x180] sm:$0xff]
        %v357 = vld [vmem:[%s305 + $0x188] sm:$0xff]
        %v358 = vld [vmem:[%s305 + $0x190] sm:$0xff]
        %v359 = vld [vmem:[%s305 + $0x198] sm:$0xff]
        %v360 = vld [vmem:[%s305 + $0x1a0] sm:$0xff]
        %v361 = vld [vmem:[%s305 + $0x1a8] sm:$0xff]
        %v362 = vld [vmem:[%s305 + $0x1b0] sm:$0xff]
        %v363 = vld [vmem:[%s305 + $0x1b8] sm:$0xff]
        %v364 = vld [vmem:[%s305 + $0x1c0] sm:$0xff]
        %v365 = vld [vmem:[%s305 + $0x1c8] sm:$0xff]
        %v366 = vld [vmem:[%s305 + $0x1d0] sm:$0xff]
        %v367 = vld [vmem:[%s305 + $0x1d8] sm:$0xff]
        %v368 = vld [vmem:[%s305 + $0x1e0] sm:$0xff]
        %v369 = vld [vmem:[%s305 + $0x1e8] sm:$0xff]
        %v370 = vld [vmem:[%s305 + $0x1f0] sm:$0xff]
        %v371 = vld [vmem:[%s305 + $0x1f8] sm:$0xff]
        %s372 = sld [smem:[#allocation2]]
        %v373 = vstv %s372
        %v374 = vsub.f32 %v308, %v373
        %v375 = vsub.f32 %v309, %v373
        %v376 = vsub.f32 %v310, %v373
        %v377 = vsub.f32 %v311, %v373
        %v378 = vsub.f32 %v312, %v373
        %v379 = vsub.f32 %v313, %v373
        %v380 = vsub.f32 %v314, %v373
        %v381 = vsub.f32 %v315, %v373
        %v382 = vsub.f32 %v316, %v373
        %v383 = vsub.f32 %v317, %v373
        %v384 = vsub.f32 %v318, %v373
        %v385 = vsub.f32 %v319, %v373
        %v386 = vsub.f32 %v320, %v373
        %v387 = vsub.f32 %v321, %v373
        %v388 = vsub.f32 %v322, %v373
        %v389 = vsub.f32 %v323, %v373
        %v390 = vsub.f32 %v324, %v373
        %v391 = vsub.f32 %v325, %v373
        %v392 = vsub.f32 %v326, %v373
        %v393 = vsub.f32 %v327, %v373
        %v394 = vsub.f32 %v328, %v373
        %v395 = vsub.f32 %v329, %v373
        %v396 = vsub.f32 %v330, %v373
        %v397 = vsub.f32 %v331, %v373
        %v398 = vsub.f32 %v332, %v373
        %v399 = vsub.f32 %v333, %v373
        %v400 = vsub.f32 %v334, %v373
        %v401 = vsub.f32 %v335, %v373
        %v402 = vsub.f32 %v336, %v373
        %v403 = vsub.f32 %v337, %v373
        %v404 = vsub.f32 %v338, %v373
        %v405 = vsub.f32 %v339, %v373
        %v406 = vsub.f32 %v340, %v373
        %v407 = vsub.f32 %v341, %v373
        %v408 = vsub.f32 %v342, %v373
        %v409 = vsub.f32 %v343, %v373
        %v410 = vsub.f32 %v344, %v373
        %v411 = vsub.f32 %v345, %v373
        %v412 = vsub.f32 %v346, %v373
        %v413 = vsub.f32 %v347, %v373
        %v414 = vsub.f32 %v348, %v373
        %v415 = vsub.f32 %v349, %v373
        %v416 = vsub.f32 %v350, %v373
        %v417 = vsub.f32 %v351, %v373
        %v418 = vsub.f32 %v352, %v373
        %v419 = vsub.f32 %v353, %v373
        %v420 = vsub.f32 %v354, %v373
        %v421 = vsub.f32 %v355, %v373
        %v422 = vsub.f32 %v356, %v373
        %v423 = vsub.f32 %v357, %v373
        %v424 = vsub.f32 %v358, %v373
        %v425 = vsub.f32 %v359, %v373
        %v426 = vsub.f32 %v360, %v373
        %v427 = vsub.f32 %v361, %v373
        %v428 = vsub.f32 %v362, %v373
        %v429 = vsub.f32 %v363, %v373
        %v430 = vsub.f32 %v364, %v373
        %v431 = vsub.f32 %v365, %v373
        %v432 = vsub.f32 %v366, %v373
        %v433 = vsub.f32 %v367, %v373
        %v434 = vsub.f32 %v368, %v373
        %v435 = vsub.f32 %v369, %v373
        %v436 = vsub.f32 %v370, %v373
        %v437 = vsub.f32 %v371, %v373
        %v438 = vld [vmem:[%s2] sm:$0xf]
        %v439 = vld [vmem:[%s3] sm:$0x1]
        %v441 = vlaneseq
        %v442 = vshrl.u32 %v441, 7
        %v443 = vsub.s32 0, %v442
        %v444 = vrot.slane %v439, %v443
        %vm446 = vcmask 31744
        %v448 = vsel %vm446, %v308, 0
        %v451 = vsel %vm446, %v309, 0
        %v454 = vsel %vm446, %v310, 0
        %v457 = vsel %vm446, %v311, 0
        %v460 = vsel %vm446, %v312, 0
        %v463 = vsel %vm446, %v313, 0
        %v466 = vsel %vm446, %v314, 0
        %v469 = vsel %vm446, %v315, 0
        %v472 = vsel %vm446, %v316, 0
        %v475 = vsel %vm446, %v317, 0
        %v478 = vsel %vm446, %v318, 0
        %v481 = vsel %vm446, %v319, 0
        %v484 = vsel %vm446, %v320, 0
        %v487 = vsel %vm446, %v321, 0
        %v490 = vsel %vm446, %v322, 0
        %v493 = vsel %vm446, %v323, 0
        %v496 = vsel %vm446, %v324, 0
        %v499 = vsel %vm446, %v325, 0
        %v502 = vsel %vm446, %v326, 0
        %v505 = vsel %vm446, %v327, 0
        %v508 = vsel %vm446, %v328, 0
        %v511 = vsel %vm446, %v329, 0
        %v514 = vsel %vm446, %v330, 0
        %v517 = vsel %vm446, %v331, 0
        %v520 = vsel %vm446, %v332, 0
        %v523 = vsel %vm446, %v333, 0
        %v526 = vsel %vm446, %v334, 0
        %v529 = vsel %vm446, %v335, 0
        %v532 = vsel %vm446, %v336, 0
        %v535 = vsel %vm446, %v337, 0
        %v538 = vsel %vm446, %v338, 0
        %v541 = vsel %vm446, %v339, 0
        %v544 = vsel %vm446, %v340, 0
        %v547 = vsel %vm446, %v341, 0
        %v550 = vsel %vm446, %v342, 0
        %v553 = vsel %vm446, %v343, 0
        %v556 = vsel %vm446, %v344, 0
        %v559 = vsel %vm446, %v345, 0
        %v562 = vsel %vm446, %v346, 0
        %v565 = vsel %vm446, %v347, 0
        %v568 = vsel %vm446, %v348, 0
        %v571 = vsel %vm446, %v349, 0
        %v574 = vsel %vm446, %v350, 0
        %v577 = vsel %vm446, %v351, 0
        %v580 = vsel %vm446, %v352, 0
        %v583 = vsel %vm446, %v353, 0
        %v586 = vsel %vm446, %v354, 0
        %v589 = vsel %vm446, %v355, 0
        %v592 = vsel %vm446, %v356, 0
        %v595 = vsel %vm446, %v357, 0
        %v598 = vsel %vm446, %v358, 0
        %v601 = vsel %vm446, %v359, 0
        %v604 = vsel %vm446, %v360, 0
        %v607 = vsel %vm446, %v361, 0
        %v610 = vsel %vm446, %v362, 0
        %v613 = vsel %vm446, %v363, 0
        %v616 = vsel %vm446, %v364, 0
        %v619 = vsel %vm446, %v365, 0
        %v622 = vsel %vm446, %v366, 0
        %v625 = vsel %vm446, %v367, 0
        %v628 = vsel %vm446, %v368, 0
        %v631 = vsel %vm446, %v369, 0
        %v634 = vsel %vm446, %v370, 0
        %v637 = vsel %vm446, %v371, 0
        %vm639 = vcmask 1043456
        %v641 = vsel %vm639, %v438, 0
        %643 = vmatprep.subr.mxu0 0.0
        %644 = vmatpush1.msra.mxu0 0.0
        %645 = vmatprep.subr.mxu0 0.0
        %646 = vmatpush1.msra.mxu0 0.0
        %647 = vmatprep.subr.mxu0 0.0
        %648 = vmatpush1.msra.mxu0 0.0
        %649 = vmatprep.subr.mxu0 0.0
        %650 = vmatpush1.msra.mxu0 0.0
        %651 = vmatprep.subr.mxu0 0.0
        %652 = vmatpush1.msra.mxu0 0.0
        %653 = vmatprep.subr.mxu0 0.0
        %654 = vmatpush1.msra.mxu0 0.0
        %655 = vmatprep.subr.mxu0 0.0
        %656 = vmatpush1.msra.mxu0 0.0
        %657 = vmatprep.subr.mxu0 0.0
        %658 = vmatpush1.msra.mxu0 0.0
        %659 = vmatprep.subr.mxu0 0.0
        %660 = vmatpush1.msra.mxu0 0.0
        %661 = vmatprep.subr.mxu0 0.0
        %662 = vmatpush1.msra.mxu0 0.0
        %663 = vmatprep.subr.mxu0 0.0
        %664 = vmatpush1.msra.mxu0 0.0
        %665 = vmatprep.subr.mxu0 0.0
        %666 = vmatpush1.msra.mxu0 0.0
        %667 = vmatprep.subr.mxu0 0.0
        %668 = vmatpush1.msra.mxu0 0.0
        %669 = vmatprep.subr.mxu0 0.0
        %670 = vmatpush1.msra.mxu0 0.0
        %671 = vmatprep.subr.mxu0 0.0
        %672 = vmatpush1.msra.mxu0 0.0
        %673 = vmatprep.subr.mxu0 0.0
        %674 = vmatpush1.msra.mxu0 %v641
        %675 = vmatprep.subr.mxu0 0.0
        %676 = vmatpush2.msra.mxu0 0.0
        %677 = vmatprep.subr.mxu0 0.0
        %678 = vmatpush2.msra.mxu0 0.0
        %679 = vmatprep.subr.mxu0 0.0
        %680 = vmatpush2.msra.mxu0 0.0
        %681 = vmatprep.subr.mxu0 0.0
        %682 = vmatpush2.msra.mxu0 0.0
        %683 = vmatprep.subr.mxu0 0.0
        %684 = vmatpush2.msra.mxu0 0.0
        %685 = vmatprep.subr.mxu0 0.0
        %686 = vmatpush2.msra.mxu0 0.0
        %687 = vmatprep.subr.mxu0 0.0
        %688 = vmatpush2.msra.mxu0 0.0
        %689 = vmatprep.subr.mxu0 0.0
        %690 = vmatpush2.msra.mxu0 0.0
        %691 = vmatprep.subr.mxu0 0.0
        %692 = vmatpush2.msra.mxu0 0.0
        %693 = vmatprep.subr.mxu0 0.0
        %694 = vmatpush2.msra.mxu0 0.0
        %695 = vmatprep.subr.mxu0 0.0
        %696 = vmatpush2.msra.mxu0 0.0
        %697 = vmatprep.subr.mxu0 0.0
        %698 = vmatpush2.msra.mxu0 0.0
        %699 = vmatprep.subr.mxu0 0.0
        %700 = vmatpush2.msra.mxu0 0.0
        %701 = vmatprep.subr.mxu0 0.0
        %702 = vmatpush2.msra.mxu0 0.0
        %703 = vmatprep.subr.mxu0 0.0
        %704 = vmatpush2.msra.mxu0 0.0
        %705 = vmatprep.subr.mxu0 0.0
        %706 = vmatpush2.msra.mxu0 0.0
        %707 = vmatprep.mubr.f32.mxu0 0.0
        %708 = vmatmul.mubr.f32.gmra.mxu0 %v448
        %v709 = vpop.f32.mrf.mxu0
        %v710 = vadd.f32 %v444, %v709
        %v711 = vpop.f32.mrf.mxu0
        %712 = vmatprep.mubr.f32.mxu0 0.0
        %713 = vmatmul.mubr.f32.gmra.mxu0 %v451
        %v714 = vpop.f32.mrf.mxu0
        %v715 = vadd.f32 %v444, %v714
        %v716 = vpop.f32.mrf.mxu0
        %717 = vmatprep.mubr.f32.mxu0 0.0
        %718 = vmatmul.mubr.f32.gmra.mxu0 %v454
        %v719 = vpop.f32.mrf.mxu0
        %v720 = vadd.f32 %v444, %v719
        %v721 = vpop.f32.mrf.mxu0
        %722 = vmatprep.mubr.f32.mxu0 0.0
        %723 = vmatmul.mubr.f32.gmra.mxu0 %v457
        %v724 = vpop.f32.mrf.mxu0
        %v725 = vadd.f32 %v444, %v724
        %v726 = vpop.f32.mrf.mxu0
        %727 = vmatprep.mubr.f32.mxu0 0.0
        %728 = vmatmul.mubr.f32.gmra.mxu0 %v460
        %v729 = vpop.f32.mrf.mxu0
        %v730 = vadd.f32 %v444, %v729
        %v731 = vpop.f32.mrf.mxu0
        %732 = vmatprep.mubr.f32.mxu0 0.0
        %733 = vmatmul.mubr.f32.gmra.mxu0 %v463
        %v734 = vpop.f32.mrf.mxu0
        %v735 = vadd.f32 %v444, %v734
        %v736 = vpop.f32.mrf.mxu0
        %737 = vmatprep.mubr.f32.mxu0 0.0
        %738 = vmatmul.mubr.f32.gmra.mxu0 %v466
        %v739 = vpop.f32.mrf.mxu0
        %v740 = vadd.f32 %v444, %v739
        %v741 = vpop.f32.mrf.mxu0
        %742 = vmatprep.mubr.f32.mxu0 0.0
        %743 = vmatmul.mubr.f32.gmra.mxu0 %v469
        %v744 = vpop.f32.mrf.mxu0
        %v745 = vadd.f32 %v444, %v744
        %v746 = vpop.f32.mrf.mxu0
        %747 = vmatprep.mubr.f32.mxu0 0.0
        %748 = vmatmul.mubr.f32.gmra.mxu0 %v472
        %v749 = vpop.f32.mrf.mxu0
        %v750 = vadd.f32 %v444, %v749
        %v751 = vpop.f32.mrf.mxu0
        %752 = vmatprep.mubr.f32.mxu0 0.0
        %753 = vmatmul.mubr.f32.gmra.mxu0 %v475
        %v754 = vpop.f32.mrf.mxu0
        %v755 = vadd.f32 %v444, %v754
        %v756 = vpop.f32.mrf.mxu0
        %757 = vmatprep.mubr.f32.mxu0 0.0
        %758 = vmatmul.mubr.f32.gmra.mxu0 %v478
        %v759 = vpop.f32.mrf.mxu0
        %v760 = vadd.f32 %v444, %v759
        %v761 = vpop.f32.mrf.mxu0
        %762 = vmatprep.mubr.f32.mxu0 0.0
        %763 = vmatmul.mubr.f32.gmra.mxu0 %v481
        %v764 = vpop.f32.mrf.mxu0
        %v765 = vadd.f32 %v444, %v764
        %v766 = vpop.f32.mrf.mxu0
        %767 = vmatprep.mubr.f32.mxu0 0.0
        %768 = vmatmul.mubr.f32.gmra.mxu0 %v484
        %v769 = vpop.f32.mrf.mxu0
        %v770 = vadd.f32 %v444, %v769
        %v771 = vpop.f32.mrf.mxu0
        %772 = vmatprep.mubr.f32.mxu0 0.0
        %773 = vmatmul.mubr.f32.gmra.mxu0 %v487
        %v774 = vpop.f32.mrf.mxu0
        %v775 = vadd.f32 %v444, %v774
        %v776 = vpop.f32.mrf.mxu0
        %777 = vmatprep.mubr.f32.mxu0 0.0
        %778 = vmatmul.mubr.f32.gmra.mxu0 %v490
        %v779 = vpop.f32.mrf.mxu0
        %v780 = vadd.f32 %v444, %v779
        %v781 = vpop.f32.mrf.mxu0
        %782 = vmatprep.mubr.f32.mxu0 0.0
        %783 = vmatmul.mubr.f32.gmra.mxu0 %v493
        %v784 = vpop.f32.mrf.mxu0
        %v785 = vadd.f32 %v444, %v784
        %v786 = vpop.f32.mrf.mxu0
        %787 = vmatprep.mubr.f32.mxu0 0.0
        %788 = vmatmul.mubr.f32.gmra.mxu0 %v496
        %v789 = vpop.f32.mrf.mxu0
        %v790 = vadd.f32 %v444, %v789
        %v791 = vpop.f32.mrf.mxu0
        %792 = vmatprep.mubr.f32.mxu0 0.0
        %793 = vmatmul.mubr.f32.gmra.mxu0 %v499
        %v794 = vpop.f32.mrf.mxu0
        %v795 = vadd.f32 %v444, %v794
        %v796 = vpop.f32.mrf.mxu0
        %797 = vmatprep.mubr.f32.mxu0 0.0
        %798 = vmatmul.mubr.f32.gmra.mxu0 %v502
        %v799 = vpop.f32.mrf.mxu0
        %v800 = vadd.f32 %v444, %v799
        %v801 = vpop.f32.mrf.mxu0
        %802 = vmatprep.mubr.f32.mxu0 0.0
        %803 = vmatmul.mubr.f32.gmra.mxu0 %v505
        %v804 = vpop.f32.mrf.mxu0
        %v805 = vadd.f32 %v444, %v804
        %v806 = vpop.f32.mrf.mxu0
        %807 = vmatprep.mubr.f32.mxu0 0.0
        %808 = vmatmul.mubr.f32.gmra.mxu0 %v508
        %v809 = vpop.f32.mrf.mxu0
        %v810 = vadd.f32 %v444, %v809
        %v811 = vpop.f32.mrf.mxu0
        %812 = vmatprep.mubr.f32.mxu0 0.0
        %813 = vmatmul.mubr.f32.gmra.mxu0 %v511
        %v814 = vpop.f32.mrf.mxu0
        %v815 = vadd.f32 %v444, %v814
        %v816 = vpop.f32.mrf.mxu0
        %817 = vmatprep.mubr.f32.mxu0 0.0
        %818 = vmatmul.mubr.f32.gmra.mxu0 %v514
        %v819 = vpop.f32.mrf.mxu0
        %v820 = vadd.f32 %v444, %v819
        %v821 = vpop.f32.mrf.mxu0
        %822 = vmatprep.mubr.f32.mxu0 0.0
        %823 = vmatmul.mubr.f32.gmra.mxu0 %v517
        %v824 = vpop.f32.mrf.mxu0
        %v825 = vadd.f32 %v444, %v824
        %v826 = vpop.f32.mrf.mxu0
        %827 = vmatprep.mubr.f32.mxu0 0.0
        %828 = vmatmul.mubr.f32.gmra.mxu0 %v520
        %v829 = vpop.f32.mrf.mxu0
        %v830 = vadd.f32 %v444, %v829
        %v831 = vpop.f32.mrf.mxu0
        %832 = vmatprep.mubr.f32.mxu0 0.0
        %833 = vmatmul.mubr.f32.gmra.mxu0 %v523
        %v834 = vpop.f32.mrf.mxu0
        %v835 = vadd.f32 %v444, %v834
        %v836 = vpop.f32.mrf.mxu0
        %837 = vmatprep.mubr.f32.mxu0 0.0
        %838 = vmatmul.mubr.f32.gmra.mxu0 %v526
        %v839 = vpop.f32.mrf.mxu0
        %v840 = vadd.f32 %v444, %v839
        %v841 = vpop.f32.mrf.mxu0
        %842 = vmatprep.mubr.f32.mxu0 0.0
        %843 = vmatmul.mubr.f32.gmra.mxu0 %v529
        %v844 = vpop.f32.mrf.mxu0
        %v845 = vadd.f32 %v444, %v844
        %v846 = vpop.f32.mrf.mxu0
        %847 = vmatprep.mubr.f32.mxu0 0.0
        %848 = vmatmul.mubr.f32.gmra.mxu0 %v532
        %v849 = vpop.f32.mrf.mxu0
        %v850 = vadd.f32 %v444, %v849
        %v851 = vpop.f32.mrf.mxu0
        %852 = vmatprep.mubr.f32.mxu0 0.0
        %853 = vmatmul.mubr.f32.gmra.mxu0 %v535
        %v854 = vpop.f32.mrf.mxu0
        %v855 = vadd.f32 %v444, %v854
        %v856 = vpop.f32.mrf.mxu0
        %857 = vmatprep.mubr.f32.mxu0 0.0
        %858 = vmatmul.mubr.f32.gmra.mxu0 %v538
        %v859 = vpop.f32.mrf.mxu0
        %v860 = vadd.f32 %v444, %v859
        %v861 = vpop.f32.mrf.mxu0
        %862 = vmatprep.mubr.f32.mxu0 0.0
        %863 = vmatmul.mubr.f32.gmra.mxu0 %v541
        %v864 = vpop.f32.mrf.mxu0
        %v865 = vadd.f32 %v444, %v864
        %v866 = vpop.f32.mrf.mxu0
        %867 = vmatprep.mubr.f32.mxu0 0.0
        %868 = vmatmul.mubr.f32.gmra.mxu0 %v544
        %v869 = vpop.f32.mrf.mxu0
        %v870 = vadd.f32 %v444, %v869
        %v871 = vpop.f32.mrf.mxu0
        %872 = vmatprep.mubr.f32.mxu0 0.0
        %873 = vmatmul.mubr.f32.gmra.mxu0 %v547
        %v874 = vpop.f32.mrf.mxu0
        %v875 = vadd.f32 %v444, %v874
        %v876 = vpop.f32.mrf.mxu0
        %877 = vmatprep.mubr.f32.mxu0 0.0
        %878 = vmatmul.mubr.f32.gmra.mxu0 %v550
        %v879 = vpop.f32.mrf.mxu0
        %v880 = vadd.f32 %v444, %v879
        %v881 = vpop.f32.mrf.mxu0
        %882 = vmatprep.mubr.f32.mxu0 0.0
        %883 = vmatmul.mubr.f32.gmra.mxu0 %v553
        %v884 = vpop.f32.mrf.mxu0
        %v885 = vadd.f32 %v444, %v884
        %v886 = vpop.f32.mrf.mxu0
        %887 = vmatprep.mubr.f32.mxu0 0.0
        %888 = vmatmul.mubr.f32.gmra.mxu0 %v556
        %v889 = vpop.f32.mrf.mxu0
        %v890 = vadd.f32 %v444, %v889
        %v891 = vpop.f32.mrf.mxu0
        %892 = vmatprep.mubr.f32.mxu0 0.0
        %893 = vmatmul.mubr.f32.gmra.mxu0 %v559
        %v894 = vpop.f32.mrf.mxu0
        %v895 = vadd.f32 %v444, %v894
        %v896 = vpop.f32.mrf.mxu0
        %897 = vmatprep.mubr.f32.mxu0 0.0
        %898 = vmatmul.mubr.f32.gmra.mxu0 %v562
        %v899 = vpop.f32.mrf.mxu0
        %v900 = vadd.f32 %v444, %v899
        %v901 = vpop.f32.mrf.mxu0
        %902 = vmatprep.mubr.f32.mxu0 0.0
        %903 = vmatmul.mubr.f32.gmra.mxu0 %v565
        %v904 = vpop.f32.mrf.mxu0
        %v905 = vadd.f32 %v444, %v904
        %v906 = vpop.f32.mrf.mxu0
        %907 = vmatprep.mubr.f32.mxu0 0.0
        %908 = vmatmul.mubr.f32.gmra.mxu0 %v568
        %v909 = vpop.f32.mrf.mxu0
        %v910 = vadd.f32 %v444, %v909
        %v911 = vpop.f32.mrf.mxu0
        %912 = vmatprep.mubr.f32.mxu0 0.0
        %913 = vmatmul.mubr.f32.gmra.mxu0 %v571
        %v914 = vpop.f32.mrf.mxu0
        %v915 = vadd.f32 %v444, %v914
        %v916 = vpop.f32.mrf.mxu0
        %917 = vmatprep.mubr.f32.mxu0 0.0
        %918 = vmatmul.mubr.f32.gmra.mxu0 %v574
        %v919 = vpop.f32.mrf.mxu0
        %v920 = vadd.f32 %v444, %v919
        %v921 = vpop.f32.mrf.mxu0
        %922 = vmatprep.mubr.f32.mxu0 0.0
        %923 = vmatmul.mubr.f32.gmra.mxu0 %v577
        %v924 = vpop.f32.mrf.mxu0
        %v925 = vadd.f32 %v444, %v924
        %v926 = vpop.f32.mrf.mxu0
        %927 = vmatprep.mubr.f32.mxu0 0.0
        %928 = vmatmul.mubr.f32.gmra.mxu0 %v580
        %v929 = vpop.f32.mrf.mxu0
        %v930 = vadd.f32 %v444, %v929
        %v931 = vpop.f32.mrf.mxu0
        %932 = vmatprep.mubr.f32.mxu0 0.0
        %933 = vmatmul.mubr.f32.gmra.mxu0 %v583
        %v934 = vpop.f32.mrf.mxu0
        %v935 = vadd.f32 %v444, %v934
        %v936 = vpop.f32.mrf.mxu0
        %937 = vmatprep.mubr.f32.mxu0 0.0
        %938 = vmatmul.mubr.f32.gmra.mxu0 %v586
        %v939 = vpop.f32.mrf.mxu0
        %v940 = vadd.f32 %v444, %v939
        %v941 = vpop.f32.mrf.mxu0
        %942 = vmatprep.mubr.f32.mxu0 0.0
        %943 = vmatmul.mubr.f32.gmra.mxu0 %v589
        %v944 = vpop.f32.mrf.mxu0
        %v945 = vadd.f32 %v444, %v944
        %v946 = vpop.f32.mrf.mxu0
        %947 = vmatprep.mubr.f32.mxu0 0.0
        %948 = vmatmul.mubr.f32.gmra.mxu0 %v592
        %v949 = vpop.f32.mrf.mxu0
        %v950 = vadd.f32 %v444, %v949
        %v951 = vpop.f32.mrf.mxu0
        %952 = vmatprep.mubr.f32.mxu0 0.0
        %953 = vmatmul.mubr.f32.gmra.mxu0 %v595
        %v954 = vpop.f32.mrf.mxu0
        %v955 = vadd.f32 %v444, %v954
        %v956 = vpop.f32.mrf.mxu0
        %957 = vmatprep.mubr.f32.mxu0 0.0
        %958 = vmatmul.mubr.f32.gmra.mxu0 %v598
        %v959 = vpop.f32.mrf.mxu0
        %v960 = vadd.f32 %v444, %v959
        %v961 = vpop.f32.mrf.mxu0
        %962 = vmatprep.mubr.f32.mxu0 0.0
        %963 = vmatmul.mubr.f32.gmra.mxu0 %v601
        %v964 = vpop.f32.mrf.mxu0
        %v965 = vadd.f32 %v444, %v964
        %v966 = vpop.f32.mrf.mxu0
        %967 = vmatprep.mubr.f32.mxu0 0.0
        %968 = vmatmul.mubr.f32.gmra.mxu0 %v604
        %v969 = vpop.f32.mrf.mxu0
        %v970 = vadd.f32 %v444, %v969
        %v971 = vpop.f32.mrf.mxu0
        %972 = vmatprep.mubr.f32.mxu0 0.0
        %973 = vmatmul.mubr.f32.gmra.mxu0 %v607
        %v974 = vpop.f32.mrf.mxu0
        %v975 = vadd.f32 %v444, %v974
        %v976 = vpop.f32.mrf.mxu0
        %977 = vmatprep.mubr.f32.mxu0 0.0
        %978 = vmatmul.mubr.f32.gmra.mxu0 %v610
        %v979 = vpop.f32.mrf.mxu0
        %v980 = vadd.f32 %v444, %v979
        %v981 = vpop.f32.mrf.mxu0
        %982 = vmatprep.mubr.f32.mxu0 0.0
        %983 = vmatmul.mubr.f32.gmra.mxu0 %v613
        %v984 = vpop.f32.mrf.mxu0
        %v985 = vadd.f32 %v444, %v984
        %v986 = vpop.f32.mrf.mxu0
        %987 = vmatprep.mubr.f32.mxu0 0.0
        %988 = vmatmul.mubr.f32.gmra.mxu0 %v616
        %v989 = vpop.f32.mrf.mxu0
        %v990 = vadd.f32 %v444, %v989
        %v991 = vpop.f32.mrf.mxu0
        %992 = vmatprep.mubr.f32.mxu0 0.0
        %993 = vmatmul.mubr.f32.gmra.mxu0 %v619
        %v994 = vpop.f32.mrf.mxu0
        %v995 = vadd.f32 %v444, %v994
        %v996 = vpop.f32.mrf.mxu0
        %997 = vmatprep.mubr.f32.mxu0 0.0
        %998 = vmatmul.mubr.f32.gmra.mxu0 %v622
        %v999 = vpop.f32.mrf.mxu0
        %v1000 = vadd.f32 %v444, %v999
        %v1001 = vpop.f32.mrf.mxu0
        %1002 = vmatprep.mubr.f32.mxu0 0.0
        %1003 = vmatmul.mubr.f32.gmra.mxu0 %v625
        %v1004 = vpop.f32.mrf.mxu0
        %v1005 = vadd.f32 %v444, %v1004
        %v1006 = vpop.f32.mrf.mxu0
        %1007 = vmatprep.mubr.f32.mxu0 0.0
        %1008 = vmatmul.mubr.f32.gmra.mxu0 %v628
        %v1009 = vpop.f32.mrf.mxu0
        %v1010 = vadd.f32 %v444, %v1009
        %v1011 = vpop.f32.mrf.mxu0
        %1012 = vmatprep.mubr.f32.mxu0 0.0
        %1013 = vmatmul.mubr.f32.gmra.mxu0 %v631
        %v1014 = vpop.f32.mrf.mxu0
        %v1015 = vadd.f32 %v444, %v1014
        %v1016 = vpop.f32.mrf.mxu0
        %1017 = vmatprep.mubr.f32.mxu0 0.0
        %1018 = vmatmul.mubr.f32.gmra.mxu0 %v634
        %v1019 = vpop.f32.mrf.mxu0
        %v1020 = vadd.f32 %v444, %v1019
        %v1021 = vpop.f32.mrf.mxu0
        %1022 = vmatprep.mubr.f32.mxu0 0.0
        %1023 = vmatmul.mubr.f32.gmra.mxu0 %v637
        %v1024 = vpop.f32.mrf.mxu0
        %v1025 = vadd.f32 %v444, %v1024
        %v1026 = vpop.f32.mrf.mxu0
        %1027 = vdwg.mxu0
        %v1028 = vmax.f32 %v710, 0.0
        %v1029 = vmax.f32 %v715, 0.0
        %v1030 = vmax.f32 %v720, 0.0
        %v1031 = vmax.f32 %v725, 0.0
        %v1032 = vmax.f32 %v730, 0.0
        %v1033 = vmax.f32 %v735, 0.0
        %v1034 = vmax.f32 %v740, 0.0
        %v1035 = vmax.f32 %v745, 0.0
        %v1036 = vmax.f32 %v750, 0.0
        %v1037 = vmax.f32 %v755, 0.0
        %v1038 = vmax.f32 %v760, 0.0
        %v1039 = vmax.f32 %v765, 0.0
        %v1040 = vmax.f32 %v770, 0.0
        %v1041 = vmax.f32 %v775, 0.0
        %v1042 = vmax.f32 %v780, 0.0
        %v1043 = vmax.f32 %v785, 0.0
        %v1044 = vmax.f32 %v790, 0.0
        %v1045 = vmax.f32 %v795, 0.0
        %v1046 = vmax.f32 %v800, 0.0
        %v1047 = vmax.f32 %v805, 0.0
        %v1048 = vmax.f32 %v810, 0.0
        %v1049 = vmax.f32 %v815, 0.0
        %v1050 = vmax.f32 %v820, 0.0
        %v1051 = vmax.f32 %v825, 0.0
        %v1052 = vmax.f32 %v830, 0.0
        %v1053 = vmax.f32 %v835, 0.0
        %v1054 = vmax.f32 %v840, 0.0
        %v1055 = vmax.f32 %v845, 0.0
        %v1056 = vmax.f32 %v850, 0.0
        %v1057 = vmax.f32 %v855, 0.0
        %v1058 = vmax.f32 %v860, 0.0
        %v1059 = vmax.f32 %v865, 0.0
        %v1060 = vmax.f32 %v870, 0.0
        %v1061 = vmax.f32 %v875, 0.0
        %v1062 = vmax.f32 %v880, 0.0
        %v1063 = vmax.f32 %v885, 0.0
        %v1064 = vmax.f32 %v890, 0.0
        %v1065 = vmax.f32 %v895, 0.0
        %v1066 = vmax.f32 %v900, 0.0
        %v1067 = vmax.f32 %v905, 0.0
        %v1068 = vmax.f32 %v910, 0.0
        %v1069 = vmax.f32 %v915, 0.0
        %v1070 = vmax.f32 %v920, 0.0
        %v1071 = vmax.f32 %v925, 0.0
        %v1072 = vmax.f32 %v930, 0.0
        %v1073 = vmax.f32 %v935, 0.0
        %v1074 = vmax.f32 %v940, 0.0
        %v1075 = vmax.f32 %v945, 0.0
        %v1076 = vmax.f32 %v950, 0.0
        %v1077 = vmax.f32 %v955, 0.0
        %v1078 = vmax.f32 %v960, 0.0
        %v1079 = vmax.f32 %v965, 0.0
        %v1080 = vmax.f32 %v970, 0.0
        %v1081 = vmax.f32 %v975, 0.0
        %v1082 = vmax.f32 %v980, 0.0
        %v1083 = vmax.f32 %v985, 0.0
        %v1084 = vmax.f32 %v990, 0.0
        %v1085 = vmax.f32 %v995, 0.0
        %v1086 = vmax.f32 %v1000, 0.0
        %v1087 = vmax.f32 %v1005, 0.0
        %v1088 = vmax.f32 %v1010, 0.0
        %v1089 = vmax.f32 %v1015, 0.0
        %v1090 = vmax.f32 %v1020, 0.0
        %v1091 = vmax.f32 %v1025, 0.0
        %v1092 = vld [vmem:[%s4] sm:$0xff]
        %v1093 = vld [vmem:[%s4 + $0x8] sm:$0xff]
        %v1094 = vld [vmem:[%s4 + $0x10] sm:$0xff]
        %v1095 = vld [vmem:[%s4 + $0x18] sm:$0xff]
        %v1096 = vld [vmem:[%s5] sm:$0x1]
        %v1098 = vlaneseq
        %v1099 = vshrl.u32 %v1098, 7
        %v1100 = vsub.s32 0, %v1099
        %v1101 = vrot.slane %v1096, %v1100
        %vm1103 = vcmask 261120
        %v1105 = vsel %vm1103, %v1028, 0
        %v1108 = vsel %vm1103, %v1029, 0
        %v1111 = vsel %vm1103, %v1030, 0
        %v1114 = vsel %vm1103, %v1031, 0
        %v1117 = vsel %vm1103, %v1032, 0
        %v1120 = vsel %vm1103, %v1033, 0
        %v1123 = vsel %vm1103, %v1034, 0
        %v1126 = vsel %vm1103, %v1035, 0
        %v1129 = vsel %vm1103, %v1036, 0
        %v1132 = vsel %vm1103, %v1037, 0
        %v1135 = vsel %vm1103, %v1038, 0
        %v1138 = vsel %vm1103, %v1039, 0
        %v1141 = vsel %vm1103, %v1040, 0
        %v1144 = vsel %vm1103, %v1041, 0
        %v1147 = vsel %vm1103, %v1042, 0
        %v1150 = vsel %vm1103, %v1043, 0
        %v1153 = vsel %vm1103, %v1044, 0
        %v1156 = vsel %vm1103, %v1045, 0
        %v1159 = vsel %vm1103, %v1046, 0
        %v1162 = vsel %vm1103, %v1047, 0
        %v1165 = vsel %vm1103, %v1048, 0
        %v1168 = vsel %vm1103, %v1049, 0
        %v1171 = vsel %vm1103, %v1050, 0
        %v1174 = vsel %vm1103, %v1051, 0
        %v1177 = vsel %vm1103, %v1052, 0
        %v1180 = vsel %vm1103, %v1053, 0
        %v1183 = vsel %vm1103, %v1054, 0
        %v1186 = vsel %vm1103, %v1055, 0
        %v1189 = vsel %vm1103, %v1056, 0
        %v1192 = vsel %vm1103, %v1057, 0
        %v1195 = vsel %vm1103, %v1058, 0
        %v1198 = vsel %vm1103, %v1059, 0
        %v1201 = vsel %vm1103, %v1060, 0
        %v1204 = vsel %vm1103, %v1061, 0
        %v1207 = vsel %vm1103, %v1062, 0
        %v1210 = vsel %vm1103, %v1063, 0
        %v1213 = vsel %vm1103, %v1064, 0
        %v1216 = vsel %vm1103, %v1065, 0
        %v1219 = vsel %vm1103, %v1066, 0
        %v1222 = vsel %vm1103, %v1067, 0
        %v1225 = vsel %vm1103, %v1068, 0
        %v1228 = vsel %vm1103, %v1069, 0
        %v1231 = vsel %vm1103, %v1070, 0
        %v1234 = vsel %vm1103, %v1071, 0
        %v1237 = vsel %vm1103, %v1072, 0
        %v1240 = vsel %vm1103, %v1073, 0
        %v1243 = vsel %vm1103, %v1074, 0
        %v1246 = vsel %vm1103, %v1075, 0
        %v1249 = vsel %vm1103, %v1076, 0
        %v1252 = vsel %vm1103, %v1077, 0
        %v1255 = vsel %vm1103, %v1078, 0
        %v1258 = vsel %vm1103, %v1079, 0
        %v1261 = vsel %vm1103, %v1080, 0
        %v1264 = vsel %vm1103, %v1081, 0
        %v1267 = vsel %vm1103, %v1082, 0
        %v1270 = vsel %vm1103, %v1083, 0
        %v1273 = vsel %vm1103, %v1084, 0
        %v1276 = vsel %vm1103, %v1085, 0
        %v1279 = vsel %vm1103, %v1086, 0
        %v1282 = vsel %vm1103, %v1087, 0
        %v1285 = vsel %vm1103, %v1088, 0
        %v1288 = vsel %vm1103, %v1089, 0
        %v1291 = vsel %vm1103, %v1090, 0
        %v1294 = vsel %vm1103, %v1091, 0
        %1296 = vmatprep.subr.mxu0 0.0
        %1297 = vmatpush1.msra.mxu0 0.0
        %1298 = vmatprep.subr.mxu0 0.0
        %1299 = vmatpush1.msra.mxu0 0.0
        %1300 = vmatprep.subr.mxu0 0.0
        %1301 = vmatpush1.msra.mxu0 0.0
        %1302 = vmatprep.subr.mxu0 0.0
        %1303 = vmatpush1.msra.mxu0 0.0
        %1304 = vmatprep.subr.mxu0 0.0
        %1305 = vmatpush1.msra.mxu0 0.0
        %1306 = vmatprep.subr.mxu0 0.0
        %1307 = vmatpush1.msra.mxu0 0.0
        %1308 = vmatprep.subr.mxu0 0.0
        %1309 = vmatpush1.msra.mxu0 0.0
        %1310 = vmatprep.subr.mxu0 0.0
        %1311 = vmatpush1.msra.mxu0 0.0
        %1312 = vmatprep.subr.mxu0 0.0
        %1313 = vmatpush1.msra.mxu0 0.0
        %1314 = vmatprep.subr.mxu0 0.0
        %1315 = vmatpush1.msra.mxu0 0.0
        %1316 = vmatprep.subr.mxu0 0.0
        %1317 = vmatpush1.msra.mxu0 0.0
        %1318 = vmatprep.subr.mxu0 0.0
        %1319 = vmatpush1.msra.mxu0 0.0
        %1320 = vmatprep.subr.mxu0 0.0
        %1321 = vmatpush1.msra.mxu0 %v1095
        %1322 = vmatprep.subr.mxu0 0.0
        %1323 = vmatpush1.msra.mxu0 %v1094
        %1324 = vmatprep.subr.mxu0 0.0
        %1325 = vmatpush1.msra.mxu0 %v1093
        %1326 = vmatprep.subr.mxu0 0.0
        %1327 = vmatpush1.msra.mxu0 %v1092
        %1328 = vmatprep.subr.mxu0 0.0
        %1329 = vmatpush2.msra.mxu0 0.0
        %1330 = vmatprep.subr.mxu0 0.0
        %1331 = vmatpush2.msra.mxu0 0.0
        %1332 = vmatprep.subr.mxu0 0.0
        %1333 = vmatpush2.msra.mxu0 0.0
        %1334 = vmatprep.subr.mxu0 0.0
        %1335 = vmatpush2.msra.mxu0 0.0
        %1336 = vmatprep.subr.mxu0 0.0
        %1337 = vmatpush2.msra.mxu0 0.0
        %1338 = vmatprep.subr.mxu0 0.0
        %1339 = vmatpush2.msra.mxu0 0.0
        %1340 = vmatprep.subr.mxu0 0.0
        %1341 = vmatpush2.msra.mxu0 0.0
        %1342 = vmatprep.subr.mxu0 0.0
        %1343 = vmatpush2.msra.mxu0 0.0
        %1344 = vmatprep.subr.mxu0 0.0
        %1345 = vmatpush2.msra.mxu0 0.0
        %1346 = vmatprep.subr.mxu0 0.0
        %1347 = vmatpush2.msra.mxu0 0.0
        %1348 = vmatprep.subr.mxu0 0.0
        %1349 = vmatpush2.msra.mxu0 0.0
        %1350 = vmatprep.subr.mxu0 0.0
        %1351 = vmatpush2.msra.mxu0 0.0
        %1352 = vmatprep.subr.mxu0 0.0
        %1353 = vmatpush2.msra.mxu0 0.0
        %1354 = vmatprep.subr.mxu0 0.0
        %1355 = vmatpush2.msra.mxu0 0.0
        %1356 = vmatprep.subr.mxu0 0.0
        %1357 = vmatpush2.msra.mxu0 0.0
        %1358 = vmatprep.subr.mxu0 0.0
        %1359 = vmatpush2.msra.mxu0 0.0
        %1360 = vmatprep.mubr.f32.mxu0 0.0
        %1361 = vmatmul.mubr.f32.gmra.mxu0 %v1105
        %v1362 = vpop.f32.mrf.mxu0
        %v1363 = vadd.f32 %v1101, %v1362
        %v1364 = vpop.f32.mrf.mxu0
        %1365 = vmatprep.mubr.f32.mxu0 0.0
        %1366 = vmatmul.mubr.f32.gmra.mxu0 %v1108
        %v1367 = vpop.f32.mrf.mxu0
        %v1368 = vadd.f32 %v1101, %v1367
        %v1369 = vpop.f32.mrf.mxu0
        %1370 = vmatprep.mubr.f32.mxu0 0.0
        %1371 = vmatmul.mubr.f32.gmra.mxu0 %v1111
        %v1372 = vpop.f32.mrf.mxu0
        %v1373 = vadd.f32 %v1101, %v1372
        %v1374 = vpop.f32.mrf.mxu0
        %1375 = vmatprep.mubr.f32.mxu0 0.0
        %1376 = vmatmul.mubr.f32.gmra.mxu0 %v1114
        %v1377 = vpop.f32.mrf.mxu0
        %v1378 = vadd.f32 %v1101, %v1377
        %v1379 = vpop.f32.mrf.mxu0
        %1380 = vmatprep.mubr.f32.mxu0 0.0
        %1381 = vmatmul.mubr.f32.gmra.mxu0 %v1117
        %v1382 = vpop.f32.mrf.mxu0
        %v1383 = vadd.f32 %v1101, %v1382
        %v1384 = vpop.f32.mrf.mxu0
        %1385 = vmatprep.mubr.f32.mxu0 0.0
        %1386 = vmatmul.mubr.f32.gmra.mxu0 %v1120
        %v1387 = vpop.f32.mrf.mxu0
        %v1388 = vadd.f32 %v1101, %v1387
        %v1389 = vpop.f32.mrf.mxu0
        %1390 = vmatprep.mubr.f32.mxu0 0.0
        %1391 = vmatmul.mubr.f32.gmra.mxu0 %v1123
        %v1392 = vpop.f32.mrf.mxu0
        %v1393 = vadd.f32 %v1101, %v1392
        %v1394 = vpop.f32.mrf.mxu0
        %1395 = vmatprep.mubr.f32.mxu0 0.0
        %1396 = vmatmul.mubr.f32.gmra.mxu0 %v1126
        %v1397 = vpop.f32.mrf.mxu0
        %v1398 = vadd.f32 %v1101, %v1397
        %v1399 = vpop.f32.mrf.mxu0
        %1400 = vmatprep.mubr.f32.mxu0 0.0
        %1401 = vmatmul.mubr.f32.gmra.mxu0 %v1129
        %v1402 = vpop.f32.mrf.mxu0
        %v1403 = vadd.f32 %v1101, %v1402
        %v1404 = vpop.f32.mrf.mxu0
        %1405 = vmatprep.mubr.f32.mxu0 0.0
        %1406 = vmatmul.mubr.f32.gmra.mxu0 %v1132
        %v1407 = vpop.f32.mrf.mxu0
        %v1408 = vadd.f32 %v1101, %v1407
        %v1409 = vpop.f32.mrf.mxu0
        %1410 = vmatprep.mubr.f32.mxu0 0.0
        %1411 = vmatmul.mubr.f32.gmra.mxu0 %v1135
        %v1412 = vpop.f32.mrf.mxu0
        %v1413 = vadd.f32 %v1101, %v1412
        %v1414 = vpop.f32.mrf.mxu0
        %1415 = vmatprep.mubr.f32.mxu0 0.0
        %1416 = vmatmul.mubr.f32.gmra.mxu0 %v1138
        %v1417 = vpop.f32.mrf.mxu0
        %v1418 = vadd.f32 %v1101, %v1417
        %v1419 = vpop.f32.mrf.mxu0
        %1420 = vmatprep.mubr.f32.mxu0 0.0
        %1421 = vmatmul.mubr.f32.gmra.mxu0 %v1141
        %v1422 = vpop.f32.mrf.mxu0
        %v1423 = vadd.f32 %v1101, %v1422
        %v1424 = vpop.f32.mrf.mxu0
        %1425 = vmatprep.mubr.f32.mxu0 0.0
        %1426 = vmatmul.mubr.f32.gmra.mxu0 %v1144
        %v1427 = vpop.f32.mrf.mxu0
        %v1428 = vadd.f32 %v1101, %v1427
        %v1429 = vpop.f32.mrf.mxu0
        %1430 = vmatprep.mubr.f32.mxu0 0.0
        %1431 = vmatmul.mubr.f32.gmra.mxu0 %v1147
        %v1432 = vpop.f32.mrf.mxu0
        %v1433 = vadd.f32 %v1101, %v1432
        %v1434 = vpop.f32.mrf.mxu0
        %1435 = vmatprep.mubr.f32.mxu0 0.0
        %1436 = vmatmul.mubr.f32.gmra.mxu0 %v1150
        %v1437 = vpop.f32.mrf.mxu0
        %v1438 = vadd.f32 %v1101, %v1437
        %v1439 = vpop.f32.mrf.mxu0
        %1440 = vmatprep.mubr.f32.mxu0 0.0
        %1441 = vmatmul.mubr.f32.gmra.mxu0 %v1153
        %v1442 = vpop.f32.mrf.mxu0
        %v1443 = vadd.f32 %v1101, %v1442
        %v1444 = vpop.f32.mrf.mxu0
        %1445 = vmatprep.mubr.f32.mxu0 0.0
        %1446 = vmatmul.mubr.f32.gmra.mxu0 %v1156
        %v1447 = vpop.f32.mrf.mxu0
        %v1448 = vadd.f32 %v1101, %v1447
        %v1449 = vpop.f32.mrf.mxu0
        %1450 = vmatprep.mubr.f32.mxu0 0.0
        %1451 = vmatmul.mubr.f32.gmra.mxu0 %v1159
        %v1452 = vpop.f32.mrf.mxu0
        %v1453 = vadd.f32 %v1101, %v1452
        %v1454 = vpop.f32.mrf.mxu0
        %1455 = vmatprep.mubr.f32.mxu0 0.0
        %1456 = vmatmul.mubr.f32.gmra.mxu0 %v1162
        %v1457 = vpop.f32.mrf.mxu0
        %v1458 = vadd.f32 %v1101, %v1457
        %v1459 = vpop.f32.mrf.mxu0
        %1460 = vmatprep.mubr.f32.mxu0 0.0
        %1461 = vmatmul.mubr.f32.gmra.mxu0 %v1165
        %v1462 = vpop.f32.mrf.mxu0
        %v1463 = vadd.f32 %v1101, %v1462
        %v1464 = vpop.f32.mrf.mxu0
        %1465 = vmatprep.mubr.f32.mxu0 0.0
        %1466 = vmatmul.mubr.f32.gmra.mxu0 %v1168
        %v1467 = vpop.f32.mrf.mxu0
        %v1468 = vadd.f32 %v1101, %v1467
        %v1469 = vpop.f32.mrf.mxu0
        %1470 = vmatprep.mubr.f32.mxu0 0.0
        %1471 = vmatmul.mubr.f32.gmra.mxu0 %v1171
        %v1472 = vpop.f32.mrf.mxu0
        %v1473 = vadd.f32 %v1101, %v1472
        %v1474 = vpop.f32.mrf.mxu0
        %1475 = vmatprep.mubr.f32.mxu0 0.0
        %1476 = vmatmul.mubr.f32.gmra.mxu0 %v1174
        %v1477 = vpop.f32.mrf.mxu0
        %v1478 = vadd.f32 %v1101, %v1477
        %v1479 = vpop.f32.mrf.mxu0
        %1480 = vmatprep.mubr.f32.mxu0 0.0
        %1481 = vmatmul.mubr.f32.gmra.mxu0 %v1177
        %v1482 = vpop.f32.mrf.mxu0
        %v1483 = vadd.f32 %v1101, %v1482
        %v1484 = vpop.f32.mrf.mxu0
        %1485 = vmatprep.mubr.f32.mxu0 0.0
        %1486 = vmatmul.mubr.f32.gmra.mxu0 %v1180
        %v1487 = vpop.f32.mrf.mxu0
        %v1488 = vadd.f32 %v1101, %v1487
        %v1489 = vpop.f32.mrf.mxu0
        %1490 = vmatprep.mubr.f32.mxu0 0.0
        %1491 = vmatmul.mubr.f32.gmra.mxu0 %v1183
        %v1492 = vpop.f32.mrf.mxu0
        %v1493 = vadd.f32 %v1101, %v1492
        %v1494 = vpop.f32.mrf.mxu0
        %1495 = vmatprep.mubr.f32.mxu0 0.0
        %1496 = vmatmul.mubr.f32.gmra.mxu0 %v1186
        %v1497 = vpop.f32.mrf.mxu0
        %v1498 = vadd.f32 %v1101, %v1497
        %v1499 = vpop.f32.mrf.mxu0
        %1500 = vmatprep.mubr.f32.mxu0 0.0
        %1501 = vmatmul.mubr.f32.gmra.mxu0 %v1189
        %v1502 = vpop.f32.mrf.mxu0
        %v1503 = vadd.f32 %v1101, %v1502
        %v1504 = vpop.f32.mrf.mxu0
        %1505 = vmatprep.mubr.f32.mxu0 0.0
        %1506 = vmatmul.mubr.f32.gmra.mxu0 %v1192
        %v1507 = vpop.f32.mrf.mxu0
        %v1508 = vadd.f32 %v1101, %v1507
        %v1509 = vpop.f32.mrf.mxu0
        %1510 = vmatprep.mubr.f32.mxu0 0.0
        %1511 = vmatmul.mubr.f32.gmra.mxu0 %v1195
        %v1512 = vpop.f32.mrf.mxu0
        %v1513 = vadd.f32 %v1101, %v1512
        %v1514 = vpop.f32.mrf.mxu0
        %1515 = vmatprep.mubr.f32.mxu0 0.0
        %1516 = vmatmul.mubr.f32.gmra.mxu0 %v1198
        %v1517 = vpop.f32.mrf.mxu0
        %v1518 = vadd.f32 %v1101, %v1517
        %v1519 = vpop.f32.mrf.mxu0
        %1520 = vmatprep.mubr.f32.mxu0 0.0
        %1521 = vmatmul.mubr.f32.gmra.mxu0 %v1201
        %v1522 = vpop.f32.mrf.mxu0
        %v1523 = vadd.f32 %v1101, %v1522
        %v1524 = vpop.f32.mrf.mxu0
        %1525 = vmatprep.mubr.f32.mxu0 0.0
        %1526 = vmatmul.mubr.f32.gmra.mxu0 %v1204
        %v1527 = vpop.f32.mrf.mxu0
        %v1528 = vadd.f32 %v1101, %v1527
        %v1529 = vpop.f32.mrf.mxu0
        %1530 = vmatprep.mubr.f32.mxu0 0.0
        %1531 = vmatmul.mubr.f32.gmra.mxu0 %v1207
        %v1532 = vpop.f32.mrf.mxu0
        %v1533 = vadd.f32 %v1101, %v1532
        %v1534 = vpop.f32.mrf.mxu0
        %1535 = vmatprep.mubr.f32.mxu0 0.0
        %1536 = vmatmul.mubr.f32.gmra.mxu0 %v1210
        %v1537 = vpop.f32.mrf.mxu0
        %v1538 = vadd.f32 %v1101, %v1537
        %v1539 = vpop.f32.mrf.mxu0
        %1540 = vmatprep.mubr.f32.mxu0 0.0
        %1541 = vmatmul.mubr.f32.gmra.mxu0 %v1213
        %v1542 = vpop.f32.mrf.mxu0
        %v1543 = vadd.f32 %v1101, %v1542
        %v1544 = vpop.f32.mrf.mxu0
        %1545 = vmatprep.mubr.f32.mxu0 0.0
        %1546 = vmatmul.mubr.f32.gmra.mxu0 %v1216
        %v1547 = vpop.f32.mrf.mxu0
        %v1548 = vadd.f32 %v1101, %v1547
        %v1549 = vpop.f32.mrf.mxu0
        %1550 = vmatprep.mubr.f32.mxu0 0.0
        %1551 = vmatmul.mubr.f32.gmra.mxu0 %v1219
        %v1552 = vpop.f32.mrf.mxu0
        %v1553 = vadd.f32 %v1101, %v1552
        %v1554 = vpop.f32.mrf.mxu0
        %1555 = vmatprep.mubr.f32.mxu0 0.0
        %1556 = vmatmul.mubr.f32.gmra.mxu0 %v1222
        %v1557 = vpop.f32.mrf.mxu0
        %v1558 = vadd.f32 %v1101, %v1557
        %v1559 = vpop.f32.mrf.mxu0
        %1560 = vmatprep.mubr.f32.mxu0 0.0
        %1561 = vmatmul.mubr.f32.gmra.mxu0 %v1225
        %v1562 = vpop.f32.mrf.mxu0
        %v1563 = vadd.f32 %v1101, %v1562
        %v1564 = vpop.f32.mrf.mxu0
        %1565 = vmatprep.mubr.f32.mxu0 0.0
        %1566 = vmatmul.mubr.f32.gmra.mxu0 %v1228
        %v1567 = vpop.f32.mrf.mxu0
        %v1568 = vadd.f32 %v1101, %v1567
        %v1569 = vpop.f32.mrf.mxu0
        %1570 = vmatprep.mubr.f32.mxu0 0.0
        %1571 = vmatmul.mubr.f32.gmra.mxu0 %v1231
        %v1572 = vpop.f32.mrf.mxu0
        %v1573 = vadd.f32 %v1101, %v1572
        %v1574 = vpop.f32.mrf.mxu0
        %1575 = vmatprep.mubr.f32.mxu0 0.0
        %1576 = vmatmul.mubr.f32.gmra.mxu0 %v1234
        %v1577 = vpop.f32.mrf.mxu0
        %v1578 = vadd.f32 %v1101, %v1577
        %v1579 = vpop.f32.mrf.mxu0
        %1580 = vmatprep.mubr.f32.mxu0 0.0
        %1581 = vmatmul.mubr.f32.gmra.mxu0 %v1237
        %v1582 = vpop.f32.mrf.mxu0
        %v1583 = vadd.f32 %v1101, %v1582
        %v1584 = vpop.f32.mrf.mxu0
        %1585 = vmatprep.mubr.f32.mxu0 0.0
        %1586 = vmatmul.mubr.f32.gmra.mxu0 %v1240
        %v1587 = vpop.f32.mrf.mxu0
        %v1588 = vadd.f32 %v1101, %v1587
        %v1589 = vpop.f32.mrf.mxu0
        %1590 = vmatprep.mubr.f32.mxu0 0.0
        %1591 = vmatmul.mubr.f32.gmra.mxu0 %v1243
        %v1592 = vpop.f32.mrf.mxu0
        %v1593 = vadd.f32 %v1101, %v1592
        %v1594 = vpop.f32.mrf.mxu0
        %1595 = vmatprep.mubr.f32.mxu0 0.0
        %1596 = vmatmul.mubr.f32.gmra.mxu0 %v1246
        %v1597 = vpop.f32.mrf.mxu0
        %v1598 = vadd.f32 %v1101, %v1597
        %v1599 = vpop.f32.mrf.mxu0
        %1600 = vmatprep.mubr.f32.mxu0 0.0
        %1601 = vmatmul.mubr.f32.gmra.mxu0 %v1249
        %v1602 = vpop.f32.mrf.mxu0
        %v1603 = vadd.f32 %v1101, %v1602
        %v1604 = vpop.f32.mrf.mxu0
        %1605 = vmatprep.mubr.f32.mxu0 0.0
        %1606 = vmatmul.mubr.f32.gmra.mxu0 %v1252
        %v1607 = vpop.f32.mrf.mxu0
        %v1608 = vadd.f32 %v1101, %v1607
        %v1609 = vpop.f32.mrf.mxu0
        %1610 = vmatprep.mubr.f32.mxu0 0.0
        %1611 = vmatmul.mubr.f32.gmra.mxu0 %v1255
        %v1612 = vpop.f32.mrf.mxu0
        %v1613 = vadd.f32 %v1101, %v1612
        %v1614 = vpop.f32.mrf.mxu0
        %1615 = vmatprep.mubr.f32.mxu0 0.0
        %1616 = vmatmul.mubr.f32.gmra.mxu0 %v1258
        %v1617 = vpop.f32.mrf.mxu0
        %v1618 = vadd.f32 %v1101, %v1617
        %v1619 = vpop.f32.mrf.mxu0
        %1620 = vmatprep.mubr.f32.mxu0 0.0
        %1621 = vmatmul.mubr.f32.gmra.mxu0 %v1261
        %v1622 = vpop.f32.mrf.mxu0
        %v1623 = vadd.f32 %v1101, %v1622
        %v1624 = vpop.f32.mrf.mxu0
        %1625 = vmatprep.mubr.f32.mxu0 0.0
        %1626 = vmatmul.mubr.f32.gmra.mxu0 %v1264
        %v1627 = vpop.f32.mrf.mxu0
        %v1628 = vadd.f32 %v1101, %v1627
        %v1629 = vpop.f32.mrf.mxu0
        %1630 = vmatprep.mubr.f32.mxu0 0.0
        %1631 = vmatmul.mubr.f32.gmra.mxu0 %v1267
        %v1632 = vpop.f32.mrf.mxu0
        %v1633 = vadd.f32 %v1101, %v1632
        %v1634 = vpop.f32.mrf.mxu0
        %1635 = vmatprep.mubr.f32.mxu0 0.0
        %1636 = vmatmul.mubr.f32.gmra.mxu0 %v1270
        %v1637 = vpop.f32.mrf.mxu0
        %v1638 = vadd.f32 %v1101, %v1637
        %v1639 = vpop.f32.mrf.mxu0
        %1640 = vmatprep.mubr.f32.mxu0 0.0
        %1641 = vmatmul.mubr.f32.gmra.mxu0 %v1273
        %v1642 = vpop.f32.mrf.mxu0
        %v1643 = vadd.f32 %v1101, %v1642
        %v1644 = vpop.f32.mrf.mxu0
        %1645 = vmatprep.mubr.f32.mxu0 0.0
        %1646 = vmatmul.mubr.f32.gmra.mxu0 %v1276
        %v1647 = vpop.f32.mrf.mxu0
        %v1648 = vadd.f32 %v1101, %v1647
        %v1649 = vpop.f32.mrf.mxu0
        %1650 = vmatprep.mubr.f32.mxu0 0.0
        %1651 = vmatmul.mubr.f32.gmra.mxu0 %v1279
        %v1652 = vpop.f32.mrf.mxu0
        %v1653 = vadd.f32 %v1101, %v1652
        %v1654 = vpop.f32.mrf.mxu0
        %1655 = vmatprep.mubr.f32.mxu0 0.0
        %1656 = vmatmul.mubr.f32.gmra.mxu0 %v1282
        %v1657 = vpop.f32.mrf.mxu0
        %v1658 = vadd.f32 %v1101, %v1657
        %v1659 = vpop.f32.mrf.mxu0
        %1660 = vmatprep.mubr.f32.mxu0 0.0
        %1661 = vmatmul.mubr.f32.gmra.mxu0 %v1285
        %v1662 = vpop.f32.mrf.mxu0
        %v1663 = vadd.f32 %v1101, %v1662
        %v1664 = vpop.f32.mrf.mxu0
        %1665 = vmatprep.mubr.f32.mxu0 0.0
        %1666 = vmatmul.mubr.f32.gmra.mxu0 %v1288
        %v1667 = vpop.f32.mrf.mxu0
        %v1668 = vadd.f32 %v1101, %v1667
        %v1669 = vpop.f32.mrf.mxu0
        %1670 = vmatprep.mubr.f32.mxu0 0.0
        %1671 = vmatmul.mubr.f32.gmra.mxu0 %v1291
        %v1672 = vpop.f32.mrf.mxu0
        %v1673 = vadd.f32 %v1101, %v1672
        %v1674 = vpop.f32.mrf.mxu0
        %1675 = vmatprep.mubr.f32.mxu0 0.0
        %1676 = vmatmul.mubr.f32.gmra.mxu0 %v1294
        %v1677 = vpop.f32.mrf.mxu0
        %v1678 = vadd.f32 %v1101, %v1677
        %v1679 = vpop.f32.mrf.mxu0
        %1680 = vdwg.mxu0
        %v1681 = vmax.f32 %v1363, 0.0
        %v1682 = vmax.f32 %v1368, 0.0
        %v1683 = vmax.f32 %v1373, 0.0
        %v1684 = vmax.f32 %v1378, 0.0
        %v1685 = vmax.f32 %v1383, 0.0
        %v1686 = vmax.f32 %v1388, 0.0
        %v1687 = vmax.f32 %v1393, 0.0
        %v1688 = vmax.f32 %v1398, 0.0
        %v1689 = vmax.f32 %v1403, 0.0
        %v1690 = vmax.f32 %v1408, 0.0
        %v1691 = vmax.f32 %v1413, 0.0
        %v1692 = vmax.f32 %v1418, 0.0
        %v1693 = vmax.f32 %v1423, 0.0
        %v1694 = vmax.f32 %v1428, 0.0
        %v1695 = vmax.f32 %v1433, 0.0
        %v1696 = vmax.f32 %v1438, 0.0
        %v1697 = vmax.f32 %v1443, 0.0
        %v1698 = vmax.f32 %v1448, 0.0
        %v1699 = vmax.f32 %v1453, 0.0
        %v1700 = vmax.f32 %v1458, 0.0
        %v1701 = vmax.f32 %v1463, 0.0
        %v1702 = vmax.f32 %v1468, 0.0
        %v1703 = vmax.f32 %v1473, 0.0
        %v1704 = vmax.f32 %v1478, 0.0
        %v1705 = vmax.f32 %v1483, 0.0
        %v1706 = vmax.f32 %v1488, 0.0
        %v1707 = vmax.f32 %v1493, 0.0
        %v1708 = vmax.f32 %v1498, 0.0
        %v1709 = vmax.f32 %v1503, 0.0
        %v1710 = vmax.f32 %v1508, 0.0
        %v1711 = vmax.f32 %v1513, 0.0
        %v1712 = vmax.f32 %v1518, 0.0
        %v1713 = vmax.f32 %v1523, 0.0
        %v1714 = vmax.f32 %v1528, 0.0
        %v1715 = vmax.f32 %v1533, 0.0
        %v1716 = vmax.f32 %v1538, 0.0
        %v1717 = vmax.f32 %v1543, 0.0
        %v1718 = vmax.f32 %v1548, 0.0
        %v1719 = vmax.f32 %v1553, 0.0
        %v1720 = vmax.f32 %v1558, 0.0
        %v1721 = vmax.f32 %v1563, 0.0
        %v1722 = vmax.f32 %v1568, 0.0
        %v1723 = vmax.f32 %v1573, 0.0
        %v1724 = vmax.f32 %v1578, 0.0
        %v1725 = vmax.f32 %v1583, 0.0
        %v1726 = vmax.f32 %v1588, 0.0
        %v1727 = vmax.f32 %v1593, 0.0
        %v1728 = vmax.f32 %v1598, 0.0
        %v1729 = vmax.f32 %v1603, 0.0
        %v1730 = vmax.f32 %v1608, 0.0
        %v1731 = vmax.f32 %v1613, 0.0
        %v1732 = vmax.f32 %v1618, 0.0
        %v1733 = vmax.f32 %v1623, 0.0
        %v1734 = vmax.f32 %v1628, 0.0
        %v1735 = vmax.f32 %v1633, 0.0
        %v1736 = vmax.f32 %v1638, 0.0
        %v1737 = vmax.f32 %v1643, 0.0
        %v1738 = vmax.f32 %v1648, 0.0
        %v1739 = vmax.f32 %v1653, 0.0
        %v1740 = vmax.f32 %v1658, 0.0
        %v1741 = vmax.f32 %v1663, 0.0
        %v1742 = vmax.f32 %v1668, 0.0
        %v1743 = vmax.f32 %v1673, 0.0
        %v1744 = vmax.f32 %v1678, 0.0
        %v1745 = vld [vmem:[%s6] sm:$0xff]
        %v1746 = vld [vmem:[%s6 + $0x8] sm:$0xff]
        %v1747 = vld [vmem:[%s6 + $0x10] sm:$0xff]
        %v1748 = vld [vmem:[%s6 + $0x18] sm:$0xff]
        %v1749 = vld [vmem:[%s7] sm:$0x1]
        %v1751 = vlaneseq
        %v1752 = vshrl.u32 %v1751, 7
        %v1753 = vsub.s32 0, %v1752
        %v1754 = vrot.slane %v1749, %v1753
        %v1757 = vsel %vm1103, %v1681, 0
        %v1760 = vsel %vm1103, %v1682, 0
        %v1763 = vsel %vm1103, %v1683, 0
        %v1766 = vsel %vm1103, %v1684, 0
        %v1769 = vsel %vm1103, %v1685, 0
        %v1772 = vsel %vm1103, %v1686, 0
        %v1775 = vsel %vm1103, %v1687, 0
        %v1778 = vsel %vm1103, %v1688, 0
        %v1781 = vsel %vm1103, %v1689, 0
        %v1784 = vsel %vm1103, %v1690, 0
        %v1787 = vsel %vm1103, %v1691, 0
        %v1790 = vsel %vm1103, %v1692, 0
        %v1793 = vsel %vm1103, %v1693, 0
        %v1796 = vsel %vm1103, %v1694, 0
        %v1799 = vsel %vm1103, %v1695, 0
        %v1802 = vsel %vm1103, %v1696, 0
        %v1805 = vsel %vm1103, %v1697, 0
        %v1808 = vsel %vm1103, %v1698, 0
        %v1811 = vsel %vm1103, %v1699, 0
        %v1814 = vsel %vm1103, %v1700, 0
        %v1817 = vsel %vm1103, %v1701, 0
        %v1820 = vsel %vm1103, %v1702, 0
        %v1823 = vsel %vm1103, %v1703, 0
        %v1826 = vsel %vm1103, %v1704, 0
        %v1829 = vsel %vm1103, %v1705, 0
        %v1832 = vsel %vm1103, %v1706, 0
        %v1835 = vsel %vm1103, %v1707, 0
        %v1838 = vsel %vm1103, %v1708, 0
        %v1841 = vsel %vm1103, %v1709, 0
        %v1844 = vsel %vm1103, %v1710, 0
        %v1847 = vsel %vm1103, %v1711, 0
        %v1850 = vsel %vm1103, %v1712, 0
        %v1853 = vsel %vm1103, %v1713, 0
        %v1856 = vsel %vm1103, %v1714, 0
        %v1859 = vsel %vm1103, %v1715, 0
        %v1862 = vsel %vm1103, %v1716, 0
        %v1865 = vsel %vm1103, %v1717, 0
        %v1868 = vsel %vm1103, %v1718, 0
        %v1871 = vsel %vm1103, %v1719, 0
        %v1874 = vsel %vm1103, %v1720, 0
        %v1877 = vsel %vm1103, %v1721, 0
        %v1880 = vsel %vm1103, %v1722, 0
        %v1883 = vsel %vm1103, %v1723, 0
        %v1886 = vsel %vm1103, %v1724, 0
        %v1889 = vsel %vm1103, %v1725, 0
        %v1892 = vsel %vm1103, %v1726, 0
        %v1895 = vsel %vm1103, %v1727, 0
        %v1898 = vsel %vm1103, %v1728, 0
        %v1901 = vsel %vm1103, %v1729, 0
        %v1904 = vsel %vm1103, %v1730, 0
        %v1907 = vsel %vm1103, %v1731, 0
        %v1910 = vsel %vm1103, %v1732, 0
        %v1913 = vsel %vm1103, %v1733, 0
        %v1916 = vsel %vm1103, %v1734, 0
        %v1919 = vsel %vm1103, %v1735, 0
        %v1922 = vsel %vm1103, %v1736, 0
        %v1925 = vsel %vm1103, %v1737, 0
        %v1928 = vsel %vm1103, %v1738, 0
        %v1931 = vsel %vm1103, %v1739, 0
        %v1934 = vsel %vm1103, %v1740, 0
        %v1937 = vsel %vm1103, %v1741, 0
        %v1940 = vsel %vm1103, %v1742, 0
        %v1943 = vsel %vm1103, %v1743, 0
        %v1946 = vsel %vm1103, %v1744, 0
        %1948 = vmatprep.subr.mxu0 0.0
        %1949 = vmatpush1.msra.mxu0 0.0
        %1950 = vmatprep.subr.mxu0 0.0
        %1951 = vmatpush1.msra.mxu0 0.0
        %1952 = vmatprep.subr.mxu0 0.0
        %1953 = vmatpush1.msra.mxu0 0.0
        %1954 = vmatprep.subr.mxu0 0.0
        %1955 = vmatpush1.msra.mxu0 0.0
        %1956 = vmatprep.subr.mxu0 0.0
        %1957 = vmatpush1.msra.mxu0 0.0
        %1958 = vmatprep.subr.mxu0 0.0
        %1959 = vmatpush1.msra.mxu0 0.0
        %1960 = vmatprep.subr.mxu0 0.0
        %1961 = vmatpush1.msra.mxu0 0.0
        %1962 = vmatprep.subr.mxu0 0.0
        %1963 = vmatpush1.msra.mxu0 0.0
        %1964 = vmatprep.subr.mxu0 0.0
        %1965 = vmatpush1.msra.mxu0 0.0
        %1966 = vmatprep.subr.mxu0 0.0
        %1967 = vmatpush1.msra.mxu0 0.0
        %1968 = vmatprep.subr.mxu0 0.0
        %1969 = vmatpush1.msra.mxu0 0.0
        %1970 = vmatprep.subr.mxu0 0.0
        %1971 = vmatpush1.msra.mxu0 0.0
        %1972 = vmatprep.subr.mxu0 0.0
        %1973 = vmatpush1.msra.mxu0 %v1748
        %1974 = vmatprep.subr.mxu0 0.0
        %1975 = vmatpush1.msra.mxu0 %v1747
        %1976 = vmatprep.subr.mxu0 0.0
        %1977 = vmatpush1.msra.mxu0 %v1746
        %1978 = vmatprep.subr.mxu0 0.0
        %1979 = vmatpush1.msra.mxu0 %v1745
        %1980 = vmatprep.subr.mxu0 0.0
        %1981 = vmatpush2.msra.mxu0 0.0
        %1982 = vmatprep.subr.mxu0 0.0
        %1983 = vmatpush2.msra.mxu0 0.0
        %1984 = vmatprep.subr.mxu0 0.0
        %1985 = vmatpush2.msra.mxu0 0.0
        %1986 = vmatprep.subr.mxu0 0.0
        %1987 = vmatpush2.msra.mxu0 0.0
        %1988 = vmatprep.subr.mxu0 0.0
        %1989 = vmatpush2.msra.mxu0 0.0
        %1990 = vmatprep.subr.mxu0 0.0
        %1991 = vmatpush2.msra.mxu0 0.0
        %1992 = vmatprep.subr.mxu0 0.0
        %1993 = vmatpush2.msra.mxu0 0.0
        %1994 = vmatprep.subr.mxu0 0.0
        %1995 = vmatpush2.msra.mxu0 0.0
        %1996 = vmatprep.subr.mxu0 0.0
        %1997 = vmatpush2.msra.mxu0 0.0
        %1998 = vmatprep.subr.mxu0 0.0
        %1999 = vmatpush2.msra.mxu0 0.0
        %2000 = vmatprep.subr.mxu0 0.0
        %2001 = vmatpush2.msra.mxu0 0.0
        %2002 = vmatprep.subr.mxu0 0.0
        %2003 = vmatpush2.msra.mxu0 0.0
        %2004 = vmatprep.subr.mxu0 0.0
        %2005 = vmatpush2.msra.mxu0 0.0
        %2006 = vmatprep.subr.mxu0 0.0
        %2007 = vmatpush2.msra.mxu0 0.0
        %2008 = vmatprep.subr.mxu0 0.0
        %2009 = vmatpush2.msra.mxu0 0.0
        %2010 = vmatprep.subr.mxu0 0.0
        %2011 = vmatpush2.msra.mxu0 0.0
        %2012 = vmatprep.mubr.f32.mxu0 0.0
        %2013 = vmatmul.mubr.f32.gmra.mxu0 %v1757
        %v2014 = vpop.f32.mrf.mxu0
        %v2015 = vadd.f32 %v1754, %v2014
        %v2016 = vpop.f32.mrf.mxu0
        %2017 = vmatprep.mubr.f32.mxu0 0.0
        %2018 = vmatmul.mubr.f32.gmra.mxu0 %v1760
        %v2019 = vpop.f32.mrf.mxu0
        %v2020 = vadd.f32 %v1754, %v2019
        %v2021 = vpop.f32.mrf.mxu0
        %2022 = vmatprep.mubr.f32.mxu0 0.0
        %2023 = vmatmul.mubr.f32.gmra.mxu0 %v1763
        %v2024 = vpop.f32.mrf.mxu0
        %v2025 = vadd.f32 %v1754, %v2024
        %v2026 = vpop.f32.mrf.mxu0
        %2027 = vmatprep.mubr.f32.mxu0 0.0
        %2028 = vmatmul.mubr.f32.gmra.mxu0 %v1766
        %v2029 = vpop.f32.mrf.mxu0
        %v2030 = vadd.f32 %v1754, %v2029
        %v2031 = vpop.f32.mrf.mxu0
        %2032 = vmatprep.mubr.f32.mxu0 0.0
        %2033 = vmatmul.mubr.f32.gmra.mxu0 %v1769
        %v2034 = vpop.f32.mrf.mxu0
        %v2035 = vadd.f32 %v1754, %v2034
        %v2036 = vpop.f32.mrf.mxu0
        %2037 = vmatprep.mubr.f32.mxu0 0.0
        %2038 = vmatmul.mubr.f32.gmra.mxu0 %v1772
        %v2039 = vpop.f32.mrf.mxu0
        %v2040 = vadd.f32 %v1754, %v2039
        %v2041 = vpop.f32.mrf.mxu0
        %2042 = vmatprep.mubr.f32.mxu0 0.0
        %2043 = vmatmul.mubr.f32.gmra.mxu0 %v1775
        %v2044 = vpop.f32.mrf.mxu0
        %v2045 = vadd.f32 %v1754, %v2044
        %v2046 = vpop.f32.mrf.mxu0
        %2047 = vmatprep.mubr.f32.mxu0 0.0
        %2048 = vmatmul.mubr.f32.gmra.mxu0 %v1778
        %v2049 = vpop.f32.mrf.mxu0
        %v2050 = vadd.f32 %v1754, %v2049
        %v2051 = vpop.f32.mrf.mxu0
        %2052 = vmatprep.mubr.f32.mxu0 0.0
        %2053 = vmatmul.mubr.f32.gmra.mxu0 %v1781
        %v2054 = vpop.f32.mrf.mxu0
        %v2055 = vadd.f32 %v1754, %v2054
        %v2056 = vpop.f32.mrf.mxu0
        %2057 = vmatprep.mubr.f32.mxu0 0.0
        %2058 = vmatmul.mubr.f32.gmra.mxu0 %v1784
        %v2059 = vpop.f32.mrf.mxu0
        %v2060 = vadd.f32 %v1754, %v2059
        %v2061 = vpop.f32.mrf.mxu0
        %2062 = vmatprep.mubr.f32.mxu0 0.0
        %2063 = vmatmul.mubr.f32.gmra.mxu0 %v1787
        %v2064 = vpop.f32.mrf.mxu0
        %v2065 = vadd.f32 %v1754, %v2064
        %v2066 = vpop.f32.mrf.mxu0
        %2067 = vmatprep.mubr.f32.mxu0 0.0
        %2068 = vmatmul.mubr.f32.gmra.mxu0 %v1790
        %v2069 = vpop.f32.mrf.mxu0
        %v2070 = vadd.f32 %v1754, %v2069
        %v2071 = vpop.f32.mrf.mxu0
        %2072 = vmatprep.mubr.f32.mxu0 0.0
        %2073 = vmatmul.mubr.f32.gmra.mxu0 %v1793
        %v2074 = vpop.f32.mrf.mxu0
        %v2075 = vadd.f32 %v1754, %v2074
        %v2076 = vpop.f32.mrf.mxu0
        %2077 = vmatprep.mubr.f32.mxu0 0.0
        %2078 = vmatmul.mubr.f32.gmra.mxu0 %v1796
        %v2079 = vpop.f32.mrf.mxu0
        %v2080 = vadd.f32 %v1754, %v2079
        %v2081 = vpop.f32.mrf.mxu0
        %2082 = vmatprep.mubr.f32.mxu0 0.0
        %2083 = vmatmul.mubr.f32.gmra.mxu0 %v1799
        %v2084 = vpop.f32.mrf.mxu0
        %v2085 = vadd.f32 %v1754, %v2084
        %v2086 = vpop.f32.mrf.mxu0
        %2087 = vmatprep.mubr.f32.mxu0 0.0
        %2088 = vmatmul.mubr.f32.gmra.mxu0 %v1802
        %v2089 = vpop.f32.mrf.mxu0
        %v2090 = vadd.f32 %v1754, %v2089
        %v2091 = vpop.f32.mrf.mxu0
        %2092 = vmatprep.mubr.f32.mxu0 0.0
        %2093 = vmatmul.mubr.f32.gmra.mxu0 %v1805
        %v2094 = vpop.f32.mrf.mxu0
        %v2095 = vadd.f32 %v1754, %v2094
        %v2096 = vpop.f32.mrf.mxu0
        %2097 = vmatprep.mubr.f32.mxu0 0.0
        %2098 = vmatmul.mubr.f32.gmra.mxu0 %v1808
        %v2099 = vpop.f32.mrf.mxu0
        %v2100 = vadd.f32 %v1754, %v2099
        %v2101 = vpop.f32.mrf.mxu0
        %2102 = vmatprep.mubr.f32.mxu0 0.0
        %2103 = vmatmul.mubr.f32.gmra.mxu0 %v1811
        %v2104 = vpop.f32.mrf.mxu0
        %v2105 = vadd.f32 %v1754, %v2104
        %v2106 = vpop.f32.mrf.mxu0
        %2107 = vmatprep.mubr.f32.mxu0 0.0
        %2108 = vmatmul.mubr.f32.gmra.mxu0 %v1814
        %v2109 = vpop.f32.mrf.mxu0
        %v2110 = vadd.f32 %v1754, %v2109
        %v2111 = vpop.f32.mrf.mxu0
        %2112 = vmatprep.mubr.f32.mxu0 0.0
        %2113 = vmatmul.mubr.f32.gmra.mxu0 %v1817
        %v2114 = vpop.f32.mrf.mxu0
        %v2115 = vadd.f32 %v1754, %v2114
        %v2116 = vpop.f32.mrf.mxu0
        %2117 = vmatprep.mubr.f32.mxu0 0.0
        %2118 = vmatmul.mubr.f32.gmra.mxu0 %v1820
        %v2119 = vpop.f32.mrf.mxu0
        %v2120 = vadd.f32 %v1754, %v2119
        %v2121 = vpop.f32.mrf.mxu0
        %2122 = vmatprep.mubr.f32.mxu0 0.0
        %2123 = vmatmul.mubr.f32.gmra.mxu0 %v1823
        %v2124 = vpop.f32.mrf.mxu0
        %v2125 = vadd.f32 %v1754, %v2124
        %v2126 = vpop.f32.mrf.mxu0
        %2127 = vmatprep.mubr.f32.mxu0 0.0
        %2128 = vmatmul.mubr.f32.gmra.mxu0 %v1826
        %v2129 = vpop.f32.mrf.mxu0
        %v2130 = vadd.f32 %v1754, %v2129
        %v2131 = vpop.f32.mrf.mxu0
        %2132 = vmatprep.mubr.f32.mxu0 0.0
        %2133 = vmatmul.mubr.f32.gmra.mxu0 %v1829
        %v2134 = vpop.f32.mrf.mxu0
        %v2135 = vadd.f32 %v1754, %v2134
        %v2136 = vpop.f32.mrf.mxu0
        %2137 = vmatprep.mubr.f32.mxu0 0.0
        %2138 = vmatmul.mubr.f32.gmra.mxu0 %v1832
        %v2139 = vpop.f32.mrf.mxu0
        %v2140 = vadd.f32 %v1754, %v2139
        %v2141 = vpop.f32.mrf.mxu0
        %2142 = vmatprep.mubr.f32.mxu0 0.0
        %2143 = vmatmul.mubr.f32.gmra.mxu0 %v1835
        %v2144 = vpop.f32.mrf.mxu0
        %v2145 = vadd.f32 %v1754, %v2144
        %v2146 = vpop.f32.mrf.mxu0
        %2147 = vmatprep.mubr.f32.mxu0 0.0
        %2148 = vmatmul.mubr.f32.gmra.mxu0 %v1838
        %v2149 = vpop.f32.mrf.mxu0
        %v2150 = vadd.f32 %v1754, %v2149
        %v2151 = vpop.f32.mrf.mxu0
        %2152 = vmatprep.mubr.f32.mxu0 0.0
        %2153 = vmatmul.mubr.f32.gmra.mxu0 %v1841
        %v2154 = vpop.f32.mrf.mxu0
        %v2155 = vadd.f32 %v1754, %v2154
        %v2156 = vpop.f32.mrf.mxu0
        %2157 = vmatprep.mubr.f32.mxu0 0.0
        %2158 = vmatmul.mubr.f32.gmra.mxu0 %v1844
        %v2159 = vpop.f32.mrf.mxu0
        %v2160 = vadd.f32 %v1754, %v2159
        %v2161 = vpop.f32.mrf.mxu0
        %2162 = vmatprep.mubr.f32.mxu0 0.0
        %2163 = vmatmul.mubr.f32.gmra.mxu0 %v1847
        %v2164 = vpop.f32.mrf.mxu0
        %v2165 = vadd.f32 %v1754, %v2164
        %v2166 = vpop.f32.mrf.mxu0
        %2167 = vmatprep.mubr.f32.mxu0 0.0
        %2168 = vmatmul.mubr.f32.gmra.mxu0 %v1850
        %v2169 = vpop.f32.mrf.mxu0
        %v2170 = vadd.f32 %v1754, %v2169
        %v2171 = vpop.f32.mrf.mxu0
        %2172 = vmatprep.mubr.f32.mxu0 0.0
        %2173 = vmatmul.mubr.f32.gmra.mxu0 %v1853
        %v2174 = vpop.f32.mrf.mxu0
        %v2175 = vadd.f32 %v1754, %v2174
        %v2176 = vpop.f32.mrf.mxu0
        %2177 = vmatprep.mubr.f32.mxu0 0.0
        %2178 = vmatmul.mubr.f32.gmra.mxu0 %v1856
        %v2179 = vpop.f32.mrf.mxu0
        %v2180 = vadd.f32 %v1754, %v2179
        %v2181 = vpop.f32.mrf.mxu0
        %2182 = vmatprep.mubr.f32.mxu0 0.0
        %2183 = vmatmul.mubr.f32.gmra.mxu0 %v1859
        %v2184 = vpop.f32.mrf.mxu0
        %v2185 = vadd.f32 %v1754, %v2184
        %v2186 = vpop.f32.mrf.mxu0
        %2187 = vmatprep.mubr.f32.mxu0 0.0
        %2188 = vmatmul.mubr.f32.gmra.mxu0 %v1862
        %v2189 = vpop.f32.mrf.mxu0
        %v2190 = vadd.f32 %v1754, %v2189
        %v2191 = vpop.f32.mrf.mxu0
        %2192 = vmatprep.mubr.f32.mxu0 0.0
        %2193 = vmatmul.mubr.f32.gmra.mxu0 %v1865
        %v2194 = vpop.f32.mrf.mxu0
        %v2195 = vadd.f32 %v1754, %v2194
        %v2196 = vpop.f32.mrf.mxu0
        %2197 = vmatprep.mubr.f32.mxu0 0.0
        %2198 = vmatmul.mubr.f32.gmra.mxu0 %v1868
        %v2199 = vpop.f32.mrf.mxu0
        %v2200 = vadd.f32 %v1754, %v2199
        %v2201 = vpop.f32.mrf.mxu0
        %2202 = vmatprep.mubr.f32.mxu0 0.0
        %2203 = vmatmul.mubr.f32.gmra.mxu0 %v1871
        %v2204 = vpop.f32.mrf.mxu0
        %v2205 = vadd.f32 %v1754, %v2204
        %v2206 = vpop.f32.mrf.mxu0
        %2207 = vmatprep.mubr.f32.mxu0 0.0
        %2208 = vmatmul.mubr.f32.gmra.mxu0 %v1874
        %v2209 = vpop.f32.mrf.mxu0
        %v2210 = vadd.f32 %v1754, %v2209
        %v2211 = vpop.f32.mrf.mxu0
        %2212 = vmatprep.mubr.f32.mxu0 0.0
        %2213 = vmatmul.mubr.f32.gmra.mxu0 %v1877
        %v2214 = vpop.f32.mrf.mxu0
        %v2215 = vadd.f32 %v1754, %v2214
        %v2216 = vpop.f32.mrf.mxu0
        %2217 = vmatprep.mubr.f32.mxu0 0.0
        %2218 = vmatmul.mubr.f32.gmra.mxu0 %v1880
        %v2219 = vpop.f32.mrf.mxu0
        %v2220 = vadd.f32 %v1754, %v2219
        %v2221 = vpop.f32.mrf.mxu0
        %2222 = vmatprep.mubr.f32.mxu0 0.0
        %2223 = vmatmul.mubr.f32.gmra.mxu0 %v1883
        %v2224 = vpop.f32.mrf.mxu0
        %v2225 = vadd.f32 %v1754, %v2224
        %v2226 = vpop.f32.mrf.mxu0
        %2227 = vmatprep.mubr.f32.mxu0 0.0
        %2228 = vmatmul.mubr.f32.gmra.mxu0 %v1886
        %v2229 = vpop.f32.mrf.mxu0
        %v2230 = vadd.f32 %v1754, %v2229
        %v2231 = vpop.f32.mrf.mxu0
        %2232 = vmatprep.mubr.f32.mxu0 0.0
        %2233 = vmatmul.mubr.f32.gmra.mxu0 %v1889
        %v2234 = vpop.f32.mrf.mxu0
        %v2235 = vadd.f32 %v1754, %v2234
        %v2236 = vpop.f32.mrf.mxu0
        %2237 = vmatprep.mubr.f32.mxu0 0.0
        %2238 = vmatmul.mubr.f32.gmra.mxu0 %v1892
        %v2239 = vpop.f32.mrf.mxu0
        %v2240 = vadd.f32 %v1754, %v2239
        %v2241 = vpop.f32.mrf.mxu0
        %2242 = vmatprep.mubr.f32.mxu0 0.0
        %2243 = vmatmul.mubr.f32.gmra.mxu0 %v1895
        %v2244 = vpop.f32.mrf.mxu0
        %v2245 = vadd.f32 %v1754, %v2244
        %v2246 = vpop.f32.mrf.mxu0
        %2247 = vmatprep.mubr.f32.mxu0 0.0
        %2248 = vmatmul.mubr.f32.gmra.mxu0 %v1898
        %v2249 = vpop.f32.mrf.mxu0
        %v2250 = vadd.f32 %v1754, %v2249
        %v2251 = vpop.f32.mrf.mxu0
        %2252 = vmatprep.mubr.f32.mxu0 0.0
        %2253 = vmatmul.mubr.f32.gmra.mxu0 %v1901
        %v2254 = vpop.f32.mrf.mxu0
        %v2255 = vadd.f32 %v1754, %v2254
        %v2256 = vpop.f32.mrf.mxu0
        %2257 = vmatprep.mubr.f32.mxu0 0.0
        %2258 = vmatmul.mubr.f32.gmra.mxu0 %v1904
        %v2259 = vpop.f32.mrf.mxu0
        %v2260 = vadd.f32 %v1754, %v2259
        %v2261 = vpop.f32.mrf.mxu0
        %2262 = vmatprep.mubr.f32.mxu0 0.0
        %2263 = vmatmul.mubr.f32.gmra.mxu0 %v1907
        %v2264 = vpop.f32.mrf.mxu0
        %v2265 = vadd.f32 %v1754, %v2264
        %v2266 = vpop.f32.mrf.mxu0
        %2267 = vmatprep.mubr.f32.mxu0 0.0
        %2268 = vmatmul.mubr.f32.gmra.mxu0 %v1910
        %v2269 = vpop.f32.mrf.mxu0
        %v2270 = vadd.f32 %v1754, %v2269
        %v2271 = vpop.f32.mrf.mxu0
        %2272 = vmatprep.mubr.f32.mxu0 0.0
        %2273 = vmatmul.mubr.f32.gmra.mxu0 %v1913
        %v2274 = vpop.f32.mrf.mxu0
        %v2275 = vadd.f32 %v1754, %v2274
        %v2276 = vpop.f32.mrf.mxu0
        %2277 = vmatprep.mubr.f32.mxu0 0.0
        %2278 = vmatmul.mubr.f32.gmra.mxu0 %v1916
        %v2279 = vpop.f32.mrf.mxu0
        %v2280 = vadd.f32 %v1754, %v2279
        %v2281 = vpop.f32.mrf.mxu0
        %2282 = vmatprep.mubr.f32.mxu0 0.0
        %2283 = vmatmul.mubr.f32.gmra.mxu0 %v1919
        %v2284 = vpop.f32.mrf.mxu0
        %v2285 = vadd.f32 %v1754, %v2284
        %v2286 = vpop.f32.mrf.mxu0
        %2287 = vmatprep.mubr.f32.mxu0 0.0
        %2288 = vmatmul.mubr.f32.gmra.mxu0 %v1922
        %v2289 = vpop.f32.mrf.mxu0
        %v2290 = vadd.f32 %v1754, %v2289
        %v2291 = vpop.f32.mrf.mxu0
        %2292 = vmatprep.mubr.f32.mxu0 0.0
        %2293 = vmatmul.mubr.f32.gmra.mxu0 %v1925
        %v2294 = vpop.f32.mrf.mxu0
        %v2295 = vadd.f32 %v1754, %v2294
        %v2296 = vpop.f32.mrf.mxu0
        %2297 = vmatprep.mubr.f32.mxu0 0.0
        %2298 = vmatmul.mubr.f32.gmra.mxu0 %v1928
        %v2299 = vpop.f32.mrf.mxu0
        %v2300 = vadd.f32 %v1754, %v2299
        %v2301 = vpop.f32.mrf.mxu0
        %2302 = vmatprep.mubr.f32.mxu0 0.0
        %2303 = vmatmul.mubr.f32.gmra.mxu0 %v1931
        %v2304 = vpop.f32.mrf.mxu0
        %v2305 = vadd.f32 %v1754, %v2304
        %v2306 = vpop.f32.mrf.mxu0
        %2307 = vmatprep.mubr.f32.mxu0 0.0
        %2308 = vmatmul.mubr.f32.gmra.mxu0 %v1934
        %v2309 = vpop.f32.mrf.mxu0
        %v2310 = vadd.f32 %v1754, %v2309
        %v2311 = vpop.f32.mrf.mxu0
        %2312 = vmatprep.mubr.f32.mxu0 0.0
        %2313 = vmatmul.mubr.f32.gmra.mxu0 %v1937
        %v2314 = vpop.f32.mrf.mxu0
        %v2315 = vadd.f32 %v1754, %v2314
        %v2316 = vpop.f32.mrf.mxu0
        %2317 = vmatprep.mubr.f32.mxu0 0.0
        %2318 = vmatmul.mubr.f32.gmra.mxu0 %v1940
        %v2319 = vpop.f32.mrf.mxu0
        %v2320 = vadd.f32 %v1754, %v2319
        %v2321 = vpop.f32.mrf.mxu0
        %2322 = vmatprep.mubr.f32.mxu0 0.0
        %2323 = vmatmul.mubr.f32.gmra.mxu0 %v1943
        %v2324 = vpop.f32.mrf.mxu0
        %v2325 = vadd.f32 %v1754, %v2324
        %v2326 = vpop.f32.mrf.mxu0
        %2327 = vmatprep.mubr.f32.mxu0 0.0
        %2328 = vmatmul.mubr.f32.gmra.mxu0 %v1946
        %v2329 = vpop.f32.mrf.mxu0
        %v2330 = vadd.f32 %v1754, %v2329
        %v2331 = vpop.f32.mrf.mxu0
        %2332 = vdwg.mxu0
        %2334 = vset.pattern.permute.xlu0 3
        %2335 = vperm.xlu0 %2334, %v374
        %v2336 = vpop.permute.xlu0 %2335
        %2339 = vset.pattern.permute.xlu0 3
        %2340 = vperm.xlu0 %2339, %v375
        %v2341 = vpop.permute.xlu0 %2340
        %2344 = vset.pattern.permute.xlu0 3
        %2345 = vperm.xlu0 %2344, %v376
        %v2346 = vpop.permute.xlu0 %2345
        %2349 = vset.pattern.permute.xlu0 3
        %2350 = vperm.xlu0 %2349, %v377
        %v2351 = vpop.permute.xlu0 %2350
        %2354 = vset.pattern.permute.xlu0 3
        %2355 = vperm.xlu0 %2354, %v378
        %v2356 = vpop.permute.xlu0 %2355
        %2359 = vset.pattern.permute.xlu0 3
        %2360 = vperm.xlu0 %2359, %v379
        %v2361 = vpop.permute.xlu0 %2360
        %2364 = vset.pattern.permute.xlu0 3
        %2365 = vperm.xlu0 %2364, %v380
        %v2366 = vpop.permute.xlu0 %2365
        %2369 = vset.pattern.permute.xlu0 3
        %2370 = vperm.xlu0 %2369, %v381
        %v2371 = vpop.permute.xlu0 %2370
        %2374 = vset.pattern.permute.xlu0 3
        %2375 = vperm.xlu0 %2374, %v382
        %v2376 = vpop.permute.xlu0 %2375
        %2379 = vset.pattern.permute.xlu0 3
        %2380 = vperm.xlu0 %2379, %v383
        %v2381 = vpop.permute.xlu0 %2380
        %2384 = vset.pattern.permute.xlu0 3
        %2385 = vperm.xlu0 %2384, %v384
        %v2386 = vpop.permute.xlu0 %2385
        %2389 = vset.pattern.permute.xlu0 3
        %2390 = vperm.xlu0 %2389, %v385
        %v2391 = vpop.permute.xlu0 %2390
        %2394 = vset.pattern.permute.xlu0 3
        %2395 = vperm.xlu0 %2394, %v386
        %v2396 = vpop.permute.xlu0 %2395
        %2399 = vset.pattern.permute.xlu0 3
        %2400 = vperm.xlu0 %2399, %v387
        %v2401 = vpop.permute.xlu0 %2400
        %2404 = vset.pattern.permute.xlu0 3
        %2405 = vperm.xlu0 %2404, %v388
        %v2406 = vpop.permute.xlu0 %2405
        %2409 = vset.pattern.permute.xlu0 3
        %2410 = vperm.xlu0 %2409, %v389
        %v2411 = vpop.permute.xlu0 %2410
        %2414 = vset.pattern.permute.xlu0 3
        %2415 = vperm.xlu0 %2414, %v390
        %v2416 = vpop.permute.xlu0 %2415
        %2419 = vset.pattern.permute.xlu0 3
        %2420 = vperm.xlu0 %2419, %v391
        %v2421 = vpop.permute.xlu0 %2420
        %2424 = vset.pattern.permute.xlu0 3
        %2425 = vperm.xlu0 %2424, %v392
        %v2426 = vpop.permute.xlu0 %2425
        %2429 = vset.pattern.permute.xlu0 3
        %2430 = vperm.xlu0 %2429, %v393
        %v2431 = vpop.permute.xlu0 %2430
        %2434 = vset.pattern.permute.xlu0 3
        %2435 = vperm.xlu0 %2434, %v394
        %v2436 = vpop.permute.xlu0 %2435
        %2439 = vset.pattern.permute.xlu0 3
        %2440 = vperm.xlu0 %2439, %v395
        %v2441 = vpop.permute.xlu0 %2440
        %2444 = vset.pattern.permute.xlu0 3
        %2445 = vperm.xlu0 %2444, %v396
        %v2446 = vpop.permute.xlu0 %2445
        %2449 = vset.pattern.permute.xlu0 3
        %2450 = vperm.xlu0 %2449, %v397
        %v2451 = vpop.permute.xlu0 %2450
        %2454 = vset.pattern.permute.xlu0 3
        %2455 = vperm.xlu0 %2454, %v398
        %v2456 = vpop.permute.xlu0 %2455
        %2459 = vset.pattern.permute.xlu0 3
        %2460 = vperm.xlu0 %2459, %v399
        %v2461 = vpop.permute.xlu0 %2460
        %2464 = vset.pattern.permute.xlu0 3
        %2465 = vperm.xlu0 %2464, %v400
        %v2466 = vpop.permute.xlu0 %2465
        %2469 = vset.pattern.permute.xlu0 3
        %2470 = vperm.xlu0 %2469, %v401
        %v2471 = vpop.permute.xlu0 %2470
        %2474 = vset.pattern.permute.xlu0 3
        %2475 = vperm.xlu0 %2474, %v402
        %v2476 = vpop.permute.xlu0 %2475
        %2479 = vset.pattern.permute.xlu0 3
        %2480 = vperm.xlu0 %2479, %v403
        %v2481 = vpop.permute.xlu0 %2480
        %2484 = vset.pattern.permute.xlu0 3
        %2485 = vperm.xlu0 %2484, %v404
        %v2486 = vpop.permute.xlu0 %2485
        %2489 = vset.pattern.permute.xlu0 3
        %2490 = vperm.xlu0 %2489, %v405
        %v2491 = vpop.permute.xlu0 %2490
        %2494 = vset.pattern.permute.xlu0 3
        %2495 = vperm.xlu0 %2494, %v406
        %v2496 = vpop.permute.xlu0 %2495
        %2499 = vset.pattern.permute.xlu0 3
        %2500 = vperm.xlu0 %2499, %v407
        %v2501 = vpop.permute.xlu0 %2500
        %2504 = vset.pattern.permute.xlu0 3
        %2505 = vperm.xlu0 %2504, %v408
        %v2506 = vpop.permute.xlu0 %2505
        %2509 = vset.pattern.permute.xlu0 3
        %2510 = vperm.xlu0 %2509, %v409
        %v2511 = vpop.permute.xlu0 %2510
        %2514 = vset.pattern.permute.xlu0 3
        %2515 = vperm.xlu0 %2514, %v410
        %v2516 = vpop.permute.xlu0 %2515
        %2519 = vset.pattern.permute.xlu0 3
        %2520 = vperm.xlu0 %2519, %v411
        %v2521 = vpop.permute.xlu0 %2520
        %2524 = vset.pattern.permute.xlu0 3
        %2525 = vperm.xlu0 %2524, %v412
        %v2526 = vpop.permute.xlu0 %2525
        %2529 = vset.pattern.permute.xlu0 3
        %2530 = vperm.xlu0 %2529, %v413
        %v2531 = vpop.permute.xlu0 %2530
        %2534 = vset.pattern.permute.xlu0 3
        %2535 = vperm.xlu0 %2534, %v414
        %v2536 = vpop.permute.xlu0 %2535
        %2539 = vset.pattern.permute.xlu0 3
        %2540 = vperm.xlu0 %2539, %v415
        %v2541 = vpop.permute.xlu0 %2540
        %2544 = vset.pattern.permute.xlu0 3
        %2545 = vperm.xlu0 %2544, %v416
        %v2546 = vpop.permute.xlu0 %2545
        %2549 = vset.pattern.permute.xlu0 3
        %2550 = vperm.xlu0 %2549, %v417
        %v2551 = vpop.permute.xlu0 %2550
        %2554 = vset.pattern.permute.xlu0 3
        %2555 = vperm.xlu0 %2554, %v418
        %v2556 = vpop.permute.xlu0 %2555
        %2559 = vset.pattern.permute.xlu0 3
        %2560 = vperm.xlu0 %2559, %v419
        %v2561 = vpop.permute.xlu0 %2560
        %2564 = vset.pattern.permute.xlu0 3
        %2565 = vperm.xlu0 %2564, %v420
        %v2566 = vpop.permute.xlu0 %2565
        %2569 = vset.pattern.permute.xlu0 3
        %2570 = vperm.xlu0 %2569, %v421
        %v2571 = vpop.permute.xlu0 %2570
        %2574 = vset.pattern.permute.xlu0 3
        %2575 = vperm.xlu0 %2574, %v422
        %v2576 = vpop.permute.xlu0 %2575
        %2579 = vset.pattern.permute.xlu0 3
        %2580 = vperm.xlu0 %2579, %v423
        %v2581 = vpop.permute.xlu0 %2580
        %2584 = vset.pattern.permute.xlu0 3
        %2585 = vperm.xlu0 %2584, %v424
        %v2586 = vpop.permute.xlu0 %2585
        %2589 = vset.pattern.permute.xlu0 3
        %2590 = vperm.xlu0 %2589, %v425
        %v2591 = vpop.permute.xlu0 %2590
        %2594 = vset.pattern.permute.xlu0 3
        %2595 = vperm.xlu0 %2594, %v426
        %v2596 = vpop.permute.xlu0 %2595
        %2599 = vset.pattern.permute.xlu0 3
        %2600 = vperm.xlu0 %2599, %v427
        %v2601 = vpop.permute.xlu0 %2600
        %2604 = vset.pattern.permute.xlu0 3
        %2605 = vperm.xlu0 %2604, %v428
        %v2606 = vpop.permute.xlu0 %2605
        %2609 = vset.pattern.permute.xlu0 3
        %2610 = vperm.xlu0 %2609, %v429
        %v2611 = vpop.permute.xlu0 %2610
        %2614 = vset.pattern.permute.xlu0 3
        %2615 = vperm.xlu0 %2614, %v430
        %v2616 = vpop.permute.xlu0 %2615
        %2619 = vset.pattern.permute.xlu0 3
        %2620 = vperm.xlu0 %2619, %v431
        %v2621 = vpop.permute.xlu0 %2620
        %2624 = vset.pattern.permute.xlu0 3
        %2625 = vperm.xlu0 %2624, %v432
        %v2626 = vpop.permute.xlu0 %2625
        %2629 = vset.pattern.permute.xlu0 3
        %2630 = vperm.xlu0 %2629, %v433
        %v2631 = vpop.permute.xlu0 %2630
        %2634 = vset.pattern.permute.xlu0 3
        %2635 = vperm.xlu0 %2634, %v434
        %v2636 = vpop.permute.xlu0 %2635
        %2639 = vset.pattern.permute.xlu0 3
        %2640 = vperm.xlu0 %2639, %v435
        %v2641 = vpop.permute.xlu0 %2640
        %2644 = vset.pattern.permute.xlu0 3
        %2645 = vperm.xlu0 %2644, %v436
        %v2646 = vpop.permute.xlu0 %2645
        %2649 = vset.pattern.permute.xlu0 3
        %2650 = vperm.xlu0 %2649, %v437
        %v2651 = vpop.permute.xlu0 %2650
        %v2653 = vmul.f32 %v2336, %v2015
        %v2654 = vmul.f32 %v2341, %v2020
        %v2655 = vmul.f32 %v2346, %v2025
        %v2656 = vmul.f32 %v2351, %v2030
        %v2657 = vmul.f32 %v2356, %v2035
        %v2658 = vmul.f32 %v2361, %v2040
        %v2659 = vmul.f32 %v2366, %v2045
        %v2660 = vmul.f32 %v2371, %v2050
        %v2661 = vmul.f32 %v2376, %v2055
        %v2662 = vmul.f32 %v2381, %v2060
        %v2663 = vmul.f32 %v2386, %v2065
        %v2664 = vmul.f32 %v2391, %v2070
        %v2665 = vmul.f32 %v2396, %v2075
        %v2666 = vmul.f32 %v2401, %v2080
        %v2667 = vmul.f32 %v2406, %v2085
        %v2668 = vmul.f32 %v2411, %v2090
        %v2669 = vmul.f32 %v2416, %v2095
        %v2670 = vmul.f32 %v2421, %v2100
        %v2671 = vmul.f32 %v2426, %v2105
        %v2672 = vmul.f32 %v2431, %v2110
        %v2673 = vmul.f32 %v2436, %v2115
        %v2674 = vmul.f32 %v2441, %v2120
        %v2675 = vmul.f32 %v2446, %v2125
        %v2676 = vmul.f32 %v2451, %v2130
        %v2677 = vmul.f32 %v2456, %v2135
        %v2678 = vmul.f32 %v2461, %v2140
        %v2679 = vmul.f32 %v2466, %v2145
        %v2680 = vmul.f32 %v2471, %v2150
        %v2681 = vmul.f32 %v2476, %v2155
        %v2682 = vmul.f32 %v2481, %v2160
        %v2683 = vmul.f32 %v2486, %v2165
        %v2684 = vmul.f32 %v2491, %v2170
        %v2685 = vmul.f32 %v2496, %v2175
        %v2686 = vmul.f32 %v2501, %v2180
        %v2687 = vmul.f32 %v2506, %v2185
        %v2688 = vmul.f32 %v2511, %v2190
        %v2689 = vmul.f32 %v2516, %v2195
        %v2690 = vmul.f32 %v2521, %v2200
        %v2691 = vmul.f32 %v2526, %v2205
        %v2692 = vmul.f32 %v2531, %v2210
        %v2693 = vmul.f32 %v2536, %v2215
        %v2694 = vmul.f32 %v2541, %v2220
        %v2695 = vmul.f32 %v2546, %v2225
        %v2696 = vmul.f32 %v2551, %v2230
        %v2697 = vmul.f32 %v2556, %v2235
        %v2698 = vmul.f32 %v2561, %v2240
        %v2699 = vmul.f32 %v2566, %v2245
        %v2700 = vmul.f32 %v2571, %v2250
        %v2701 = vmul.f32 %v2576, %v2255
        %v2702 = vmul.f32 %v2581, %v2260
        %v2703 = vmul.f32 %v2586, %v2265
        %v2704 = vmul.f32 %v2591, %v2270
        %v2705 = vmul.f32 %v2596, %v2275
        %v2706 = vmul.f32 %v2601, %v2280
        %v2707 = vmul.f32 %v2606, %v2285
        %v2708 = vmul.f32 %v2611, %v2290
        %v2709 = vmul.f32 %v2616, %v2295
        %v2710 = vmul.f32 %v2621, %v2300
        %v2711 = vmul.f32 %v2626, %v2305
        %v2712 = vmul.f32 %v2631, %v2310
        %v2713 = vmul.f32 %v2636, %v2315
        %v2714 = vmul.f32 %v2641, %v2320
        %v2715 = vmul.f32 %v2646, %v2325
        %v2716 = vmul.f32 %v2651, %v2330
        %2717 = vst [vmem:[%s300] sm:$0xff] %v2653
        %2718 = vst [vmem:[%s300 + $0x8] sm:$0xff] %v2654
        %2719 = vst [vmem:[%s300 + $0x10] sm:$0xff] %v2655
        %2720 = vst [vmem:[%s300 + $0x18] sm:$0xff] %v2656
        %2721 = vst [vmem:[%s300 + $0x20] sm:$0xff] %v2657
        %2722 = vst [vmem:[%s300 + $0x28] sm:$0xff] %v2658
        %2723 = vst [vmem:[%s300 + $0x30] sm:$0xff] %v2659
        %2724 = vst [vmem:[%s300 + $0x38] sm:$0xff] %v2660
        %2725 = vst [vmem:[%s300 + $0x40] sm:$0xff] %v2661
        %2726 = vst [vmem:[%s300 + $0x48] sm:$0xff] %v2662
        %2727 = vst [vmem:[%s300 + $0x50] sm:$0xff] %v2663
        %2728 = vst [vmem:[%s300 + $0x58] sm:$0xff] %v2664
        %2729 = vst [vmem:[%s300 + $0x60] sm:$0xff] %v2665
        %2730 = vst [vmem:[%s300 + $0x68] sm:$0xff] %v2666
        %2731 = vst [vmem:[%s300 + $0x70] sm:$0xff] %v2667
        %2732 = vst [vmem:[%s300 + $0x78] sm:$0xff] %v2668
        %2733 = vst [vmem:[%s300 + $0x80] sm:$0xff] %v2669
        %2734 = vst [vmem:[%s300 + $0x88] sm:$0xff] %v2670
        %2735 = vst [vmem:[%s300 + $0x90] sm:$0xff] %v2671
        %2736 = vst [vmem:[%s300 + $0x98] sm:$0xff] %v2672
        %2737 = vst [vmem:[%s300 + $0xa0] sm:$0xff] %v2673
        %2738 = vst [vmem:[%s300 + $0xa8] sm:$0xff] %v2674
        %2739 = vst [vmem:[%s300 + $0xb0] sm:$0xff] %v2675
        %2740 = vst [vmem:[%s300 + $0xb8] sm:$0xff] %v2676
        %2741 = vst [vmem:[%s300 + $0xc0] sm:$0xff] %v2677
        %2742 = vst [vmem:[%s300 + $0xc8] sm:$0xff] %v2678
        %2743 = vst [vmem:[%s300 + $0xd0] sm:$0xff] %v2679
        %2744 = vst [vmem:[%s300 + $0xd8] sm:$0xff] %v2680
        %2745 = vst [vmem:[%s300 + $0xe0] sm:$0xff] %v2681
        %2746 = vst [vmem:[%s300 + $0xe8] sm:$0xff] %v2682
        %2747 = vst [vmem:[%s300 + $0xf0] sm:$0xff] %v2683
        %2748 = vst [vmem:[%s300 + $0xf8] sm:$0xff] %v2684
        %2749 = vst [vmem:[%s300 + $0x100] sm:$0xff] %v2685
        %2750 = vst [vmem:[%s300 + $0x108] sm:$0xff] %v2686
        %2751 = vst [vmem:[%s300 + $0x110] sm:$0xff] %v2687
        %2752 = vst [vmem:[%s300 + $0x118] sm:$0xff] %v2688
        %2753 = vst [vmem:[%s300 + $0x120] sm:$0xff] %v2689
        %2754 = vst [vmem:[%s300 + $0x128] sm:$0xff] %v2690
        %2755 = vst [vmem:[%s300 + $0x130] sm:$0xff] %v2691
        %2756 = vst [vmem:[%s300 + $0x138] sm:$0xff] %v2692
        %2757 = vst [vmem:[%s300 + $0x140] sm:$0xff] %v2693
        %2758 = vst [vmem:[%s300 + $0x148] sm:$0xff] %v2694
        %2759 = vst [vmem:[%s300 + $0x150] sm:$0xff] %v2695
        %2760 = vst [vmem:[%s300 + $0x158] sm:$0xff] %v2696
        %2761 = vst [vmem:[%s300 + $0x160] sm:$0xff] %v2697
        %2762 = vst [vmem:[%s300 + $0x168] sm:$0xff] %v2698
        %2763 = vst [vmem:[%s300 + $0x170] sm:$0xff] %v2699
        %2764 = vst [vmem:[%s300 + $0x178] sm:$0xff] %v2700
        %2765 = vst [vmem:[%s300 + $0x180] sm:$0xff] %v2701
        %2766 = vst [vmem:[%s300 + $0x188] sm:$0xff] %v2702
        %2767 = vst [vmem:[%s300 + $0x190] sm:$0xff] %v2703
        %2768 = vst [vmem:[%s300 + $0x198] sm:$0xff] %v2704
        %2769 = vst [vmem:[%s300 + $0x1a0] sm:$0xff] %v2705
        %2770 = vst [vmem:[%s300 + $0x1a8] sm:$0xff] %v2706
        %2771 = vst [vmem:[%s300 + $0x1b0] sm:$0xff] %v2707
        %2772 = vst [vmem:[%s300 + $0x1b8] sm:$0xff] %v2708
        %2773 = vst [vmem:[%s300 + $0x1c0] sm:$0xff] %v2709
        %2774 = vst [vmem:[%s300 + $0x1c8] sm:$0xff] %v2710
        %2775 = vst [vmem:[%s300 + $0x1d0] sm:$0xff] %v2711
        %2776 = vst [vmem:[%s300 + $0x1d8] sm:$0xff] %v2712
        %2777 = vst [vmem:[%s300 + $0x1e0] sm:$0xff] %v2713
        %2778 = vst [vmem:[%s300 + $0x1e8] sm:$0xff] %v2714
        %2779 = vst [vmem:[%s300 + $0x1f0] sm:$0xff] %v2715
        %2780 = vst [vmem:[%s300 + $0x1f8] sm:$0xff] %v2716
        %s2781 = sand.u32 %s204, 1
        %s2782 = scalar_lea.sflag [#allocation4], %s2781
        %s2783 = sand.u32 %s204, 1
        %s2784 = smul.addr %s2783, 512
        %s2785 = scalar_lea.vmem [#allocation3], %s2784
        // Predicated region
        $region53: #{tpu_custom_call.1} parent=51 // pred_check
          %p2786 = pneg %p214
        $region54: #{tpu_custom_call.1} parent=51 // pred_check_branch
          %2788 = sbr.rel (%p2786) target = $region56
        $region55: #{tpu_custom_call.1} parent=51 // pred_region
          %s2789 = smul.u32 64, %s23
          %s2791 = ssub.s32 8192, 8192
          %2792 = vsyncadd %s2782, %s2791
          %s2793 = smul.addr %s2789, 128
          %s2794 = scalar_lea.hbm %s8, %s2793
          %s2795 = sshll.u32 %s2785, 4
          %s2796 = int_to_ptr.vmem [resolvable:$true] %s2795
          %2801 = dma.vmem_to_hbm [thread:$0]  %s2796, 8192, %s2794, %s2782, 128, 128, 8
        $region56: #{tpu_custom_call.1} parent=51 // pred_fallthru
          _
      $region52: #{tpu_custom_call.1} parent=5 // pred_fallthru
        _
      %p2802 = scmp.le.s32.totalorder 2, %s18
      // Predicated region
      $region57: #{tpu_custom_call.1} parent=5 // pred_check
        %p2803 = pneg %p2802
      $region58: #{tpu_custom_call.1} parent=5 // pred_check_branch
        %2805 = sbr.rel (%p2803) target = $region60
      $region59: #{tpu_custom_call.1} parent=5 // pred_region
        %s2806 = ssub.s32 %s18, 2
        // Predicated region
        $region61: #{tpu_custom_call.1} parent=59 // pred_check
          %p2807 = pneg %p220
        $region62: #{tpu_custom_call.1} parent=59 // pred_check_branch
          %2809 = sbr.rel (%p2807) target = $region64
        $region63: #{tpu_custom_call.1} parent=59 // pred_region
          %s2810 = sand.u32 %s205, 1
          %s2811 = scalar_lea.sflag [#allocation4], %s2810
          %s2812 = sand.u32 %s205, 1
          %s2813 = smul.addr %s2812, 512
          %s2814 = scalar_lea.vmem [#allocation3], %s2813
          %2815 = dma.done %s2811, 8192
        $region64: #{tpu_custom_call.1} parent=59 // pred_fallthru
          _
      $region60: #{tpu_custom_call.1} parent=5 // pred_fallthru
        _
    $region6: #{tpu_custom_call.1} parent=1 // loop_footer
      %s22 = sadd.s32 1, %s18
    $region7: #{tpu_custom_call.1} parent=1 // loop_footer_branch
      %17 = sbr.rel target = $region3
    $region8: #{tpu_custom_call.1} parent=1 // loop_exit
      _
    %2816 = vsyncpa [#allocation4], 1
    %s2817 = scalar_lea.sflag [#allocation4], 1
    %2818 = vsyncpa %s2817, 1

</llo_original>
